<compile_context>
chip_gen: v5e
topology: v5e:2x2
jax: 0.10.0
libtpu: 0.0.40
codegen_flags: <defaults>
</compile_context>

<pallas_src>
import jax
import jax.numpy as jnp
from jax.experimental import pallas as pl
from jax.experimental.pallas import tpu as pltpu

ALPHA = 0.1            # CELU alpha used by torchani networks
_INV_ALPHA = 1.0 / ALPHA
_LANE = 128


def _celu_f32(x):
    # CELU(x) = x if x > 0 else alpha * (exp(x/alpha) - 1)
    # Clamp the exp argument so the unselected branch never overflows, and
    # multiply by the hoisted reciprocal instead of dividing (EUP-friendly).
    neg = ALPHA * (jnp.exp(jnp.minimum(x, 0.0) * _INV_ALPHA) - 1.0)
    return jnp.where(x > 0, x, neg)


def _sequential_kernel(x_ref,
                       w1_ref, b1_ref,
                       w2_ref, b2_ref,
                       w3_ref, b3_ref,
                       o_ref):
    """Fused Linear->CELU->Linear->CELU->Linear over one row tile.

    Matmul operands are bf16, the MXU accumulates in f32, and the
    bias-add / CELU epilogues run in f32.
    """
    h = x_ref[...]                                                     # bf16 (Tm, Fin)
    h = jnp.dot(h, w1_ref[...], preferred_element_type=jnp.float32) + b1_ref[...]
    h = _celu_f32(h).astype(jnp.bfloat16)
    h = jnp.dot(h, w2_ref[...], preferred_element_type=jnp.float32) + b2_ref[...]
    h = _celu_f32(h).astype(jnp.bfloat16)
    h = jnp.dot(h, w3_ref[...], preferred_element_type=jnp.float32) + b3_ref[...]
    o_ref[...] = h.astype(o_ref.dtype)


def _round_up(v, m):
    return (v + m - 1) // m * m


def _pad2(a, rows, cols, dtype):
    r, c = a.shape
    return jnp.pad(a, ((0, rows - r), (0, cols - c))).astype(dtype)


def make_params(key, f_in, h1, h2, f_out, dtype=jnp.float32):
    """Deterministic synthetic parameters (shapes only matter).

    NOTE: weights are stored as (F_in, F_out) -- the transpose of PyTorch's
    nn.Linear.weight.  Real torchani state_dicts must be transposed on load.
    """
    ks = jax.random.split(key, 6)

    def init_w(k, fi, fo):
        return (jax.random.normal(k, (fi, fo), dtype) / jnp.sqrt(fi)).astype(dtype)

    def init_b(k, fo):
        return (0.01 * jax.random.normal(k, (1, fo), dtype)).astype(dtype)

    return dict(
        w1=init_w(ks[0], f_in, h1), b1=init_b(ks[1], h1),
        w2=init_w(ks[2], h1, h2),   b2=init_b(ks[3], h2),
        w3=init_w(ks[4], h2, f_out), b3=init_b(ks[5], f_out),
    )


def sequential_forward(input_, params, *, row_tile=512):
    """Equivalent of Sequential.forward on a (species, features) tuple.

    The chained modules only transform `features`; `species` is threaded
    through unchanged (tuple pass-through is container glue, not compute).
    """
    species, x = input_
    n, f_in = x.shape
    h1 = params["w1"].shape[1]
    h2 = params["w2"].shape[1]
    f_out = params["w3"].shape[1]

    row_tile = max(8, _round_up(int(row_tile), 8))

    # Pad feature dims to full lane width and rows to a row_tile multiple.
    f_in_p, h1_p, h2_p, f_out_p = (_round_up(d, _LANE) for d in (f_in, h1, h2, f_out))
    num_tiles = pl.cdiv(n, row_tile)
    n_p = num_tiles * row_tile

    # bf16 matmul operands (f32 accumulation inside the kernel); biases stay f32.
    x_p = _pad2(x, n_p, f_in_p, jnp.bfloat16)
    w1 = _pad2(params["w1"], f_in_p, h1_p, jnp.bfloat16)
    w2 = _pad2(params["w2"], h1_p, h2_p, jnp.bfloat16)
    w3 = _pad2(params["w3"], h2_p, f_out_p, jnp.bfloat16)
    b1 = _pad2(params["b1"], 1, h1_p, jnp.float32)
    b2 = _pad2(params["b2"], 1, h2_p, jnp.float32)
    b3 = _pad2(params["b3"], 1, f_out_p, jnp.float32)

    def whole(arr):
        # Constant block index => array stays resident in VMEM across the grid.
        return pl.BlockSpec(arr.shape, lambda i: (0, 0))

    # Explicit VMEM budget with headroom (double-buffered x/out tiles +
    # resident weights/activations); capped so it also fits v7x's 64 MiB.
    tile_bytes = row_tile * (f_in_p * 2 + f_out_p * 4          # in/out tiles
                             + (h1_p + h2_p) * 4)              # intermediate acts
    param_bytes = ((f_in_p * h1_p + h1_p * h2_p + h2_p * f_out_p) * 2
                   + (h1_p + h2_p + f_out_p) * 4)
    vmem_limit = int(min(max(4 * tile_bytes + 2 * param_bytes, 8 << 20), 48 << 20))

    out_p = pl.pallas_call(
        _sequential_kernel,
        out_shape=jax.ShapeDtypeStruct((n_p, f_out_p), x.dtype),
        grid_spec=pltpu.PrefetchScalarGridSpec(
            num_scalar_prefetch=0,
            grid=(num_tiles,),
            in_specs=[
                pl.BlockSpec((row_tile, f_in_p), lambda i: (i, 0)),
                whole(w1), whole(b1),
                whole(w2), whole(b2),
                whole(w3), whole(b3),
            ],
            out_specs=pl.BlockSpec((row_tile, f_out_p), lambda i: (i, 0)),
        ),
        compiler_params=pltpu.CompilerParams(
            dimension_semantics=("parallel",),
            vmem_limit_bytes=vmem_limit),
    )(x_p, w1, b1, w2, b2, w3, b3)

    return species, out_p[:n, :f_out]


def _reference(input_, params):
    """Plain-JAX reference mirroring the kernel numerics (bf16 operands, f32 acc)."""
    species, x = input_

    def lin(h, w, b):
        return (jnp.dot(h.astype(jnp.bfloat16), w.astype(jnp.bfloat16),
                        preferred_element_type=jnp.float32)
                + b.astype(jnp.float32))

    h = _celu_f32(lin(x, params["w1"], params["b1"]))
    h = _celu_f32(lin(h, params["w2"], params["b2"]))
    h = lin(h, params["w3"], params["b3"])
    return species, h.astype(x.dtype)


if __name__ == "__main__":
    key = jax.random.PRNGKey(0)
    k_x, k_s, k_p = jax.random.split(key, 3)

    # Small torchani-like per-atom MLP; N not a multiple of row_tile on purpose
    # (exercises the cdiv + row-padding path) and >1 grid step after padding.
    N, F_IN, H1, H2, F_OUT = 1000, 64, 96, 64, 1

    species = jax.random.randint(k_s, (N,), 0, 4, dtype=jnp.int32)
    x = jax.random.normal(k_x, (N, F_IN), dtype=jnp.float32)
    params = make_params(k_p, F_IN, H1, H2, F_OUT)

    species_out, y = sequential_forward((species, x), params, row_tile=512)
    y = jax.block_until_ready(y)

    _, y_ref = _reference((species, x), params)
    assert y.shape == (N, F_OUT)
    assert jnp.allclose(y, y_ref, atol=1e-2, rtol=1e-2)
    assert bool(jnp.all(species_out == species))

    print("KERNEL_OK")
</pallas_src>

<mosaic_0001>
module attributes {stable_mosaic.version = 11 : i64} {
  func.func @_sequential_kernel(%arg0: i32, %arg1: memref<512x128xbf16, #tpu.memory_space<vmem>>, %arg2: memref<128x128xbf16, #tpu.memory_space<vmem>>, %arg3: memref<1x128xf32, #tpu.memory_space<vmem>>, %arg4: memref<128x128xbf16, #tpu.memory_space<vmem>>, %arg5: memref<1x128xf32, #tpu.memory_space<vmem>>, %arg6: memref<128x128xbf16, #tpu.memory_space<vmem>>, %arg7: memref<1x128xf32, #tpu.memory_space<vmem>>, %arg8: memref<512x128xf32, #tpu.memory_space<vmem>>) attributes {dimension_semantics = [#tpu.dimension_semantics<parallel>], iteration_bounds = array<i64: 2>, scalar_prefetch = 0 : i64, scratch_operands = 0 : i64, tpu.core_type = #tpu.core_type<tc>, window_params = [{transform_indices = @transform_0, window_bounds = array<i64: 512, 128>}, {pipeline_mode = #tpu.pipeline_mode<synchronous>, transform_indices = @transform_1, window_bounds = array<i64: 128, 128>}, {pipeline_mode = #tpu.pipeline_mode<synchronous>, transform_indices = @transform_2, window_bounds = array<i64: 1, 128>}, {pipeline_mode = #tpu.pipeline_mode<synchronous>, transform_indices = @transform_3, window_bounds = array<i64: 128, 128>}, {pipeline_mode = #tpu.pipeline_mode<synchronous>, transform_indices = @transform_4, window_bounds = array<i64: 1, 128>}, {pipeline_mode = #tpu.pipeline_mode<synchronous>, transform_indices = @transform_5, window_bounds = array<i64: 128, 128>}, {pipeline_mode = #tpu.pipeline_mode<synchronous>, transform_indices = @transform_6, window_bounds = array<i64: 1, 128>}, {transform_indices = @transform_7, window_bounds = array<i64: 512, 128>}]} {
    %c0 = arith.constant 0 : index
    %c0_0 = arith.constant 0 : index
    %0 = vector.load %arg1[%c0, %c0_0] : memref<512x128xbf16, #tpu.memory_space<vmem>>, vector<512x128xbf16>
    %c0_1 = arith.constant 0 : index
    %c0_2 = arith.constant 0 : index
    %1 = vector.load %arg2[%c0_1, %c0_2] : memref<128x128xbf16, #tpu.memory_space<vmem>>, vector<128x128xbf16>
    %cst = arith.constant dense<0.000000e+00> : vector<512x128xf32>
    %2 = tpu.matmul %0, %1, %cst {dimension_numbers = #tpu.dot_dimension_numbers<[1], [0], [0], [1], [0, 0, 1, 1], [], []>} : vector<512x128xbf16>, vector<128x128xbf16>, vector<512x128xf32> -> vector<512x128xf32>
    %c0_3 = arith.constant 0 : index
    %c0_4 = arith.constant 0 : index
    %3 = vector.load %arg3[%c0_3, %c0_4] : memref<1x128xf32, #tpu.memory_space<vmem>>, vector<1x128xf32>
    %4 = vector.broadcast %3 : vector<1x128xf32> to vector<512x128xf32>
    %5 = arith.addf %2, %4 : vector<512x128xf32>
    %cst_5 = arith.constant 0.000000e+00 : f32
    %6 = vector.broadcast %cst_5 : f32 to vector<512x128xf32>
    %7 = arith.minimumf %5, %6 : vector<512x128xf32>
    %cst_6 = arith.constant 1.000000e+01 : f32
    %8 = vector.broadcast %cst_6 : f32 to vector<512x128xf32>
    %9 = arith.mulf %7, %8 : vector<512x128xf32>
    %10 = math.exp %9 : vector<512x128xf32>
    %cst_7 = arith.constant 1.000000e+00 : f32
    %11 = vector.broadcast %cst_7 : f32 to vector<512x128xf32>
    %12 = arith.subf %10, %11 : vector<512x128xf32>
    %cst_8 = arith.constant 1.000000e-01 : f32
    %13 = vector.broadcast %cst_8 : f32 to vector<512x128xf32>
    %14 = arith.mulf %13, %12 : vector<512x128xf32>
    %cst_9 = arith.constant 0.000000e+00 : f32
    %15 = vector.broadcast %cst_9 : f32 to vector<512x128xf32>
    %16 = arith.cmpf ogt, %5, %15 : vector<512x128xf32>
    %17 = arith.select %16, %5, %14 : vector<512x128xi1>, vector<512x128xf32>
    %18 = arith.truncf %17 : vector<512x128xf32> to vector<512x128xbf16>
    %c0_10 = arith.constant 0 : index
    %c0_11 = arith.constant 0 : index
    %19 = vector.load %arg4[%c0_10, %c0_11] : memref<128x128xbf16, #tpu.memory_space<vmem>>, vector<128x128xbf16>
    %cst_12 = arith.constant dense<0.000000e+00> : vector<512x128xf32>
    %20 = tpu.matmul %18, %19, %cst_12 {dimension_numbers = #tpu.dot_dimension_numbers<[1], [0], [0], [1], [0, 0, 1, 1], [], []>} : vector<512x128xbf16>, vector<128x128xbf16>, vector<512x128xf32> -> vector<512x128xf32>
    %c0_13 = arith.constant 0 : index
    %c0_14 = arith.constant 0 : index
    %21 = vector.load %arg5[%c0_13, %c0_14] : memref<1x128xf32, #tpu.memory_space<vmem>>, vector<1x128xf32>
    %22 = vector.broadcast %21 : vector<1x128xf32> to vector<512x128xf32>
    %23 = arith.addf %20, %22 : vector<512x128xf32>
    %cst_15 = arith.constant 0.000000e+00 : f32
    %24 = vector.broadcast %cst_15 : f32 to vector<512x128xf32>
    %25 = arith.minimumf %23, %24 : vector<512x128xf32>
    %cst_16 = arith.constant 1.000000e+01 : f32
    %26 = vector.broadcast %cst_16 : f32 to vector<512x128xf32>
    %27 = arith.mulf %25, %26 : vector<512x128xf32>
    %28 = math.exp %27 : vector<512x128xf32>
    %cst_17 = arith.constant 1.000000e+00 : f32
    %29 = vector.broadcast %cst_17 : f32 to vector<512x128xf32>
    %30 = arith.subf %28, %29 : vector<512x128xf32>
    %cst_18 = arith.constant 1.000000e-01 : f32
    %31 = vector.broadcast %cst_18 : f32 to vector<512x128xf32>
    %32 = arith.mulf %31, %30 : vector<512x128xf32>
    %cst_19 = arith.constant 0.000000e+00 : f32
    %33 = vector.broadcast %cst_19 : f32 to vector<512x128xf32>
    %34 = arith.cmpf ogt, %23, %33 : vector<512x128xf32>
    %35 = arith.select %34, %23, %32 : vector<512x128xi1>, vector<512x128xf32>
    %36 = arith.truncf %35 : vector<512x128xf32> to vector<512x128xbf16>
    %c0_20 = arith.constant 0 : index
    %c0_21 = arith.constant 0 : index
    %37 = vector.load %arg6[%c0_20, %c0_21] : memref<128x128xbf16, #tpu.memory_space<vmem>>, vector<128x128xbf16>
    %cst_22 = arith.constant dense<0.000000e+00> : vector<512x128xf32>
    %38 = tpu.matmul %36, %37, %cst_22 {dimension_numbers = #tpu.dot_dimension_numbers<[1], [0], [0], [1], [0, 0, 1, 1], [], []>} : vector<512x128xbf16>, vector<128x128xbf16>, vector<512x128xf32> -> vector<512x128xf32>
    %c0_23 = arith.constant 0 : index
    %c0_24 = arith.constant 0 : index
    %39 = vector.load %arg7[%c0_23, %c0_24] : memref<1x128xf32, #tpu.memory_space<vmem>>, vector<1x128xf32>
    %40 = vector.broadcast %39 : vector<1x128xf32> to vector<512x128xf32>
    %41 = arith.addf %38, %40 : vector<512x128xf32>
    %c0_25 = arith.constant 0 : index
    %c0_26 = arith.constant 0 : index
    %42 = vector.load %arg8[%c0_25, %c0_26] : memref<512x128xf32, #tpu.memory_space<vmem>>, vector<512x128xf32>
    tpu.vector_store %arg8[%c0_25, %c0_26], %41 {strides = array<i32>} : memref<512x128xf32, #tpu.memory_space<vmem>>, vector<512x128xf32>,
    return
  }
  func.func @transform_0(%arg0: i32) -> (i32, i32) {
    %c0_i32 = arith.constant 0 : i32
    %c0_i32_0 = arith.constant 0 : i32
    return %arg0, %c0_i32 : i32, i32
  }
  func.func @transform_1(%arg0: i32) -> (i32, i32) {
    %c0_i32 = arith.constant 0 : i32
    %c0_i32_0 = arith.constant 0 : i32
    %c0_i32_1 = arith.constant 0 : i32
    return %c0_i32, %c0_i32_0 : i32, i32
  }
  func.func @transform_2(%arg0: i32) -> (i32, i32) {
    %c0_i32 = arith.constant 0 : i32
    %c0_i32_0 = arith.constant 0 : i32
    %c0_i32_1 = arith.constant 0 : i32
    return %c0_i32, %c0_i32_0 : i32, i32
  }
  func.func @transform_3(%arg0: i32) -> (i32, i32) {
    %c0_i32 = arith.constant 0 : i32
    %c0_i32_0 = arith.constant 0 : i32
    %c0_i32_1 = arith.constant 0 : i32
    return %c0_i32, %c0_i32_0 : i32, i32
  }
  func.func @transform_4(%arg0: i32) -> (i32, i32) {
    %c0_i32 = arith.constant 0 : i32
    %c0_i32_0 = arith.constant 0 : i32
    %c0_i32_1 = arith.constant 0 : i32
    return %c0_i32, %c0_i32_0 : i32, i32
  }
  func.func @transform_5(%arg0: i32) -> (i32, i32) {
    %c0_i32 = arith.constant 0 : i32
    %c0_i32_0 = arith.constant 0 : i32
    %c0_i32_1 = arith.constant 0 : i32
    return %c0_i32, %c0_i32_0 : i32, i32
  }
  func.func @transform_6(%arg0: i32) -> (i32, i32) {
    %c0_i32 = arith.constant 0 : i32
    %c0_i32_0 = arith.constant 0 : i32
    %c0_i32_1 = arith.constant 0 : i32
    return %c0_i32, %c0_i32_0 : i32, i32
  }
  func.func @transform_7(%arg0: i32) -> (i32, i32) {
    %c0_i32 = arith.constant 0 : i32
    %c0_i32_0 = arith.constant 0 : i32
    return %arg0, %c0_i32 : i32, i32
  }
}

</mosaic_0001>

<llo_original>
// kernel: tpu_custom_call.1
$region0: #{tpu_custom_call.1}
  #allocation0 [shape = 'u32[]', space=smem, size = 0x4, offset = 0x4, fixed_abs, tag = 'smem constant byte address 0x4 - core index']
  #allocation1 [shape = 'u32[72,128]{1,0:T(1,128)}', space=vmem, size = 0x9000, scoped, tag = 'internal scratch']
  %s0 = inlined_call_operand.hbm [shape: bf16[1024,128], index: 0, kind: input, shape index: {}]
  %s1 = inlined_call_operand.hbm [shape: bf16[128,128], index: 1, kind: input, shape index: {}]
  %s2 = inlined_call_operand.vmem [shape: f32[1,128], index: 2, kind: input, shape index: {}]
  %s3 = inlined_call_operand.hbm [shape: bf16[128,128], index: 3, kind: input, shape index: {}]
  %s4 = inlined_call_operand.vmem [shape: f32[1,128], index: 4, kind: input, shape index: {}]
  %s5 = inlined_call_operand.hbm [shape: bf16[128,128], index: 5, kind: input, shape index: {}]
  %s6 = inlined_call_operand.vmem [shape: f32[1,128], index: 6, kind: input, shape index: {}]
  %s7 = inlined_call_operand.hbm [shape: f32[1024,128], index: 7, kind: output, shape index: {}]
  %s8 = sld [smem:[#allocation0]]
  $region77: #{tpu_custom_call.1} parent=0
    _
  %s10 = ssub.s32 1, %s8
  %s11 = scalar_select 0, %s10, %s8
  $region1: #{tpu_custom_call.1} parent=0
    #allocation2 [shape = 'u8[262144]{0}', space=vmem, size = 0x40000, scoped, tag = 'input window, operand 0']
    #allocation3 [shape = 's32[2]{0}', space=sflag, size = 0x8, scoped, tag = 'scoped memory for tpu_custom_call.1']
    #allocation4 [shape = 's32[2]{0}', space=sflag, size = 0x8, scoped, tag = 'scoped memory for tpu_custom_call.1']
    #allocation5 [shape = 'u8[32768]{0}', space=vmem, size = 0x8000, scoped, tag = 'input window, operand 1, single buffered']
    #allocation6 [shape = 's32[1]{0}', space=sflag, size = 0x4, scoped, tag = 'scoped memory for tpu_custom_call.1']
    #allocation7 [shape = 'u8[32768]{0}', space=vmem, size = 0x8000, scoped, tag = 'input window, operand 3, single buffered']
    #allocation8 [shape = 'u8[32768]{0}', space=vmem, size = 0x8000, scoped, tag = 'input window, operand 5, single buffered']
    #allocation9 [shape = 's32[1]{0}', space=sflag, size = 0x4, scoped, tag = 'scoped memory for tpu_custom_call.1']
    #allocation10 [shape = 'u8[524288]{0}', space=vmem, size = 0x80000, scoped, tag = 'output window, operand 0']
    %12 = vsyncpa [#allocation3], 0
    %s13 = scalar_lea.sflag [#allocation3], 1
    %14 = vsyncpa %s13, 0
    %15 = vsyncpa [#allocation6], 0
    %16 = vsyncpa [#allocation9], 0
    %17 = vsyncpa [#allocation4], 0
    %s18 = scalar_lea.sflag [#allocation4], 1
    %19 = vsyncpa %s18, 0
    loop: start=0, step=1, limit=4
    $region2: #{tpu_custom_call.1} parent=1 // loop_pre_header
      _
    $region3: #{tpu_custom_call.1} parent=1 // loop_header
      %s21 = sphi 0, %s25
      %p22 = scmp.ge.s32.totalorder %s21, 4
      %s31 = sphi 0, %s33
      %s34 = sphi 0, %s31
      %s35 = sphi 0, %s34
      %s51 = sphi 0, %s35
      %s55 = sphi 0, %s55
      %s57 = sphi 0, %s55
      %s58 = sphi 0, %s57
      %s72 = sphi 0, %s58
      %s76 = sphi 0, %s76
      %s78 = sphi 0, %s76
      %s79 = sphi 0, %s78
      %s93 = sphi 0, %s79
      %s97 = sphi 0, %s97
      %s99 = sphi 0, %s97
      %s100 = sphi 0, %s99
      %s114 = sphi 0, %s100
      %s118 = sphi 0, %s118
      %s120 = sphi 0, %s118
      %s121 = sphi 0, %s120
      %s135 = sphi 0, %s121
      %s139 = sphi 0, %s139
      %s141 = sphi 0, %s139
      %s142 = sphi 0, %s141
      %s156 = sphi 0, %s142
      %s160 = sphi 0, %s160
      %s162 = sphi 0, %s160
      %s163 = sphi 0, %s162
      %s177 = sphi 0, %s163
      %s183 = sphi 0, %s185
      %s186 = sphi 0, %s183
      %s187 = sphi 0, %s186
      %s203 = sphi 0, %s187
    $region4: #{tpu_custom_call.1} parent=1 // loop_header_branch
      %24 = sbr.rel (%p22) target = $region8
    $region5: #{tpu_custom_call.1} parent=1 // loop_body
      %s26 = ssub.s32 %s21, 1
      %s27 = ssub.s32 %s21, 2
      %s28 = sadd.s32 %s21, 1
      %s29 = ssub.s32 %s21, %s28
      %p30 = scmp.eq.s32.totalorder %s29, 0
      %s32 = sadd.s32 %s31, 1
      %s33 = scalar_select %p30, %s31, %s32
      %p36 = pneg %p30
      %p37 = scmp.eq.s32.totalorder %s21, 1
      %p38 = por %p36, %p37
      %p39 = scmp.ne.s32.totalorder %s31, %s34
      %p40 = scmp.eq.s32.totalorder %s21, 0
      %p41 = por %p39, %p40
      %p42 = scmp.ne.s32.totalorder %s31, %s34
      %p43 = scmp.eq.s32.totalorder %s26, 1
      %p44 = por %p42, %p43
      %p45 = scmp.ne.s32.totalorder %s34, %s35
      %p46 = scmp.eq.s32.totalorder %s26, 0
      %p47 = por %p45, %p46
      %p48 = scmp.ne.s32.totalorder %s34, %s35
      %p49 = scmp.eq.s32.totalorder %s27, 1
      %p50 = por %p48, %p49
      %p52 = scmp.ne.s32.totalorder %s35, %s51
      %p53 = scmp.eq.s32.totalorder %s27, 0
      %p54 = por %p52, %p53
      %s56 = sadd.s32 %s55, 1
      %p59 = scmp.eq.s32.totalorder %s21, 1
      %p60 = scmp.ne.s32.totalorder %s55, %s57
      %p61 = scmp.eq.s32.totalorder %s21, 0
      %p62 = por %p60, %p61
      %p63 = scmp.ne.s32.totalorder %s55, %s57
      %p64 = scmp.eq.s32.totalorder %s26, 1
      %p65 = por %p63, %p64
      %p66 = scmp.ne.s32.totalorder %s57, %s58
      %p67 = scmp.eq.s32.totalorder %s26, 0
      %p68 = por %p66, %p67
      %p69 = scmp.ne.s32.totalorder %s57, %s58
      %p70 = scmp.eq.s32.totalorder %s27, 1
      %p71 = por %p69, %p70
      %p73 = scmp.ne.s32.totalorder %s58, %s72
      %p74 = scmp.eq.s32.totalorder %s27, 0
      %p75 = por %p73, %p74
      %s77 = sadd.s32 %s76, 1
      %p80 = scmp.eq.s32.totalorder %s21, 1
      %p81 = scmp.ne.s32.totalorder %s76, %s78
      %p82 = scmp.eq.s32.totalorder %s21, 0
      %p83 = por %p81, %p82
      %p84 = scmp.ne.s32.totalorder %s76, %s78
      %p85 = scmp.eq.s32.totalorder %s26, 1
      %p86 = por %p84, %p85
      %p87 = scmp.ne.s32.totalorder %s78, %s79
      %p88 = scmp.eq.s32.totalorder %s26, 0
      %p89 = por %p87, %p88
      %p90 = scmp.ne.s32.totalorder %s78, %s79
      %p91 = scmp.eq.s32.totalorder %s27, 1
      %p92 = por %p90, %p91
      %p94 = scmp.ne.s32.totalorder %s79, %s93
      %p95 = scmp.eq.s32.totalorder %s27, 0
      %p96 = por %p94, %p95
      %s98 = sadd.s32 %s97, 1
      %p101 = scmp.eq.s32.totalorder %s21, 1
      %p102 = scmp.ne.s32.totalorder %s97, %s99
      %p103 = scmp.eq.s32.totalorder %s21, 0
      %p104 = por %p102, %p103
      %p105 = scmp.ne.s32.totalorder %s97, %s99
      %p106 = scmp.eq.s32.totalorder %s26, 1
      %p107 = por %p105, %p106
      %p108 = scmp.ne.s32.totalorder %s99, %s100
      %p109 = scmp.eq.s32.totalorder %s26, 0
      %p110 = por %p108, %p109
      %p111 = scmp.ne.s32.totalorder %s99, %s100
      %p112 = scmp.eq.s32.totalorder %s27, 1
      %p113 = por %p111, %p112
      %p115 = scmp.ne.s32.totalorder %s100, %s114
      %p116 = scmp.eq.s32.totalorder %s27, 0
      %p117 = por %p115, %p116
      %s119 = sadd.s32 %s118, 1
      %p122 = scmp.eq.s32.totalorder %s21, 1
      %p123 = scmp.ne.s32.totalorder %s118, %s120
      %p124 = scmp.eq.s32.totalorder %s21, 0
      %p125 = por %p123, %p124
      %p126 = scmp.ne.s32.totalorder %s118, %s120
      %p127 = scmp.eq.s32.totalorder %s26, 1
      %p128 = por %p126, %p127
      %p129 = scmp.ne.s32.totalorder %s120, %s121
      %p130 = scmp.eq.s32.totalorder %s26, 0
      %p131 = por %p129, %p130
      %p132 = scmp.ne.s32.totalorder %s120, %s121
      %p133 = scmp.eq.s32.totalorder %s27, 1
      %p134 = por %p132, %p133
      %p136 = scmp.ne.s32.totalorder %s121, %s135
      %p137 = scmp.eq.s32.totalorder %s27, 0
      %p138 = por %p136, %p137
      %s140 = sadd.s32 %s139, 1
      %p143 = scmp.eq.s32.totalorder %s21, 1
      %p144 = scmp.ne.s32.totalorder %s139, %s141
      %p145 = scmp.eq.s32.totalorder %s21, 0
      %p146 = por %p144, %p145
      %p147 = scmp.ne.s32.totalorder %s139, %s141
      %p148 = scmp.eq.s32.totalorder %s26, 1
      %p149 = por %p147, %p148
      %p150 = scmp.ne.s32.totalorder %s141, %s142
      %p151 = scmp.eq.s32.totalorder %s26, 0
      %p152 = por %p150, %p151
      %p153 = scmp.ne.s32.totalorder %s141, %s142
      %p154 = scmp.eq.s32.totalorder %s27, 1
      %p155 = por %p153, %p154
      %p157 = scmp.ne.s32.totalorder %s142, %s156
      %p158 = scmp.eq.s32.totalorder %s27, 0
      %p159 = por %p157, %p158
      %s161 = sadd.s32 %s160, 1
      %p164 = scmp.eq.s32.totalorder %s21, 1
      %p165 = scmp.ne.s32.totalorder %s160, %s162
      %p166 = scmp.eq.s32.totalorder %s21, 0
      %p167 = por %p165, %p166
      %p168 = scmp.ne.s32.totalorder %s160, %s162
      %p169 = scmp.eq.s32.totalorder %s26, 1
      %p170 = por %p168, %p169
      %p171 = scmp.ne.s32.totalorder %s162, %s163
      %p172 = scmp.eq.s32.totalorder %s26, 0
      %p173 = por %p171, %p172
      %p174 = scmp.ne.s32.totalorder %s162, %s163
      %p175 = scmp.eq.s32.totalorder %s27, 1
      %p176 = por %p174, %p175
      %p178 = scmp.ne.s32.totalorder %s163, %s177
      %p179 = scmp.eq.s32.totalorder %s27, 0
      %p180 = por %p178, %p179
      %s181 = ssub.s32 %s21, %s28
      %p182 = scmp.eq.s32.totalorder %s181, 0
      %s184 = sadd.s32 %s183, 1
      %s185 = scalar_select %p182, %s183, %s184
      %p188 = pneg %p182
      %p189 = scmp.eq.s32.totalorder %s21, 1
      %p190 = por %p188, %p189
      %p191 = scmp.ne.s32.totalorder %s183, %s186
      %p192 = scmp.eq.s32.totalorder %s21, 0
      %p193 = por %p191, %p192
      %p194 = scmp.ne.s32.totalorder %s183, %s186
      %p195 = scmp.eq.s32.totalorder %s26, 1
      %p196 = por %p194, %p195
      %p197 = scmp.ne.s32.totalorder %s186, %s187
      %p198 = scmp.eq.s32.totalorder %s26, 0
      %p199 = por %p197, %p198
      %p200 = scmp.ne.s32.totalorder %s186, %s187
      %p201 = scmp.eq.s32.totalorder %s27, 1
      %p202 = por %p200, %p201
      %p204 = scmp.ne.s32.totalorder %s187, %s203
      %p205 = scmp.eq.s32.totalorder %s27, 0
      %p206 = por %p204, %p205
      %p207 = scmp.le.s32.totalorder 1, %s21
      %p208 = scmp.lt.s32.totalorder %s21, 3
      %p209 = pnand %p207, %p208
      %p210 = pneg %p209
      // Predicated region
      $region9: #{tpu_custom_call.1} parent=5 // pred_check
        _
      $region10: #{tpu_custom_call.1} parent=5 // pred_check_branch
        %212 = sbr.rel (%p209) target = $region12
      $region11: #{tpu_custom_call.1} parent=5 // pred_region
        %s213 = ssub.s32 %s21, 1
        // Predicated region
        $region13: #{tpu_custom_call.1} parent=11 // pred_check
          %p214 = pneg %p68
        $region14: #{tpu_custom_call.1} parent=11 // pred_check_branch
          %216 = sbr.rel (%p214) target = $region16
        $region15: #{tpu_custom_call.1} parent=11 // pred_region
          %218 = vsyncadd [#allocation6], 0
          %s219 = sshll.u32 %s1, 4
          %s220 = int_to_ptr.hbm [resolvable:$true] %s219
          %s221 = sshll.u32 [#allocation5], 4
          %s222 = int_to_ptr.vmem [resolvable:$true] %s221
          %227 = dma.hbm_to_vmem [thread:$0]  %s220, 1024, %s222, [#allocation6], 64, 64, 4
        $region16: #{tpu_custom_call.1} parent=11 // pred_fallthru
          _
        // Predicated region
        $region17: #{tpu_custom_call.1} parent=11 // pred_check
          %p228 = pneg %p89
        $region18: #{tpu_custom_call.1} parent=11 // pred_check_branch
          %230 = sbr.rel (%p228) target = $region20
        $region19: #{tpu_custom_call.1} parent=11 // pred_region
          _
        $region20: #{tpu_custom_call.1} parent=11 // pred_fallthru
          _
        // Predicated region
        $region21: #{tpu_custom_call.1} parent=11 // pred_check
          %p231 = pneg %p110
        $region22: #{tpu_custom_call.1} parent=11 // pred_check_branch
          %233 = sbr.rel (%p231) target = $region24
        $region23: #{tpu_custom_call.1} parent=11 // pred_region
          %235 = vsyncadd [#allocation6], 0
          %s236 = sshll.u32 %s3, 4
          %s237 = int_to_ptr.hbm [resolvable:$true] %s236
          %s238 = sshll.u32 [#allocation7], 4
          %s239 = int_to_ptr.vmem [resolvable:$true] %s238
          %244 = dma.hbm_to_vmem [thread:$0]  %s237, 1024, %s239, [#allocation6], 64, 64, 4
        $region24: #{tpu_custom_call.1} parent=11 // pred_fallthru
          _
        // Predicated region
        $region25: #{tpu_custom_call.1} parent=11 // pred_check
          %p245 = pneg %p131
        $region26: #{tpu_custom_call.1} parent=11 // pred_check_branch
          %247 = sbr.rel (%p245) target = $region28
        $region27: #{tpu_custom_call.1} parent=11 // pred_region
          _
        $region28: #{tpu_custom_call.1} parent=11 // pred_fallthru
          _
        // Predicated region
        $region29: #{tpu_custom_call.1} parent=11 // pred_check
          %p248 = pneg %p152
        $region30: #{tpu_custom_call.1} parent=11 // pred_check_branch
          %250 = sbr.rel (%p248) target = $region32
        $region31: #{tpu_custom_call.1} parent=11 // pred_region
          %252 = vsyncadd [#allocation9], 0
          %s253 = sshll.u32 %s5, 4
          %s254 = int_to_ptr.hbm [resolvable:$true] %s253
          %s255 = sshll.u32 [#allocation8], 4
          %s256 = int_to_ptr.vmem [resolvable:$true] %s255
          %261 = dma.hbm_to_vmem [thread:$0]  %s254, 1024, %s256, [#allocation9], 64, 64, 4
        $region32: #{tpu_custom_call.1} parent=11 // pred_fallthru
          _
        // Predicated region
        $region33: #{tpu_custom_call.1} parent=11 // pred_check
          %p262 = pneg %p173
        $region34: #{tpu_custom_call.1} parent=11 // pred_check_branch
          %264 = sbr.rel (%p262) target = $region36
        $region35: #{tpu_custom_call.1} parent=11 // pred_region
          _
        $region36: #{tpu_custom_call.1} parent=11 // pred_fallthru
          _
      $region12: #{tpu_custom_call.1} parent=5 // pred_fallthru
        _
      %p265 = scmp.lt.s32.totalorder %s21, 2
      // Predicated region
      $region37: #{tpu_custom_call.1} parent=5 // pred_check
        %p266 = pneg %p265
      $region38: #{tpu_custom_call.1} parent=5 // pred_check_branch
        %268 = sbr.rel (%p266) target = $region40
      $region39: #{tpu_custom_call.1} parent=5 // pred_region
        // Predicated region
        $region41: #{tpu_custom_call.1} parent=39 // pred_check
          %p269 = pneg %p41
        $region42: #{tpu_custom_call.1} parent=39 // pred_check_branch
          %271 = sbr.rel (%p269) target = $region44
        $region43: #{tpu_custom_call.1} parent=39 // pred_region
          %s272 = sand.u32 %s31, 1
          %s273 = scalar_lea.sflag [#allocation3], %s272
          %s274 = sand.u32 %s31, 1
          %s275 = smul.addr %s274, 256
          %s276 = scalar_lea.vmem [#allocation2], %s275
          %s277 = smul.u32 64, %s21
          %279 = vsyncadd %s273, 0
          %s280 = smul.addr %s277, 4
          %s281 = scalar_lea.hbm %s0, %s280
          %s282 = sshll.u32 %s281, 4
          %s283 = int_to_ptr.hbm [resolvable:$true] %s282
          %s284 = sshll.u32 %s276, 4
          %s285 = int_to_ptr.vmem [resolvable:$true] %s284
          %290 = dma.hbm_to_vmem [thread:$0]  %s283, 4096, %s285, %s273, 64, 64, 4
        $region44: #{tpu_custom_call.1} parent=39 // pred_fallthru
          _
      $region40: #{tpu_custom_call.1} parent=5 // pred_fallthru
        _
      %p291 = scmp.le.s32.totalorder 1, %s21
      %p292 = scmp.lt.s32.totalorder %s21, 3
      %p293 = pnand %p291, %p292
      %p294 = pneg %p293
      // Predicated region
      $region45: #{tpu_custom_call.1} parent=5 // pred_check
        _
      $region46: #{tpu_custom_call.1} parent=5 // pred_check_branch
        %296 = sbr.rel (%p293) target = $region48
      $region47: #{tpu_custom_call.1} parent=5 // pred_region
        %s297 = ssub.s32 %s21, 1
        %s298 = sand.u32 %s34, 1
        %s299 = scalar_lea.sflag [#allocation3], %s298
        %s300 = sand.u32 %s34, 1
        %s301 = smul.addr %s300, 256
        %s302 = scalar_lea.vmem [#allocation2], %s301
        // Predicated region
        $region49: #{tpu_custom_call.1} parent=47 // pred_check
          %p303 = pneg %p47
        $region50: #{tpu_custom_call.1} parent=47 // pred_check_branch
          %305 = sbr.rel (%p303) target = $region52
        $region51: #{tpu_custom_call.1} parent=47 // pred_region
          %307 = dma.done %s299, 4096
        $region52: #{tpu_custom_call.1} parent=47 // pred_fallthru
          _
        // Predicated region
        $region53: #{tpu_custom_call.1} parent=47 // pred_check
          %p308 = pneg %p68
        $region54: #{tpu_custom_call.1} parent=47 // pred_check_branch
          %310 = sbr.rel (%p308) target = $region56
        $region55: #{tpu_custom_call.1} parent=47 // pred_region
          %312 = dma.done [#allocation6], 1024
        $region56: #{tpu_custom_call.1} parent=47 // pred_fallthru
          _
        // Predicated region
        $region57: #{tpu_custom_call.1} parent=47 // pred_check
          %p313 = pneg %p110
        $region58: #{tpu_custom_call.1} parent=47 // pred_check_branch
          %315 = sbr.rel (%p313) target = $region60
        $region59: #{tpu_custom_call.1} parent=47 // pred_region
          %317 = dma.done [#allocation6], 1024
        $region60: #{tpu_custom_call.1} parent=47 // pred_fallthru
          _
        // Predicated region
        $region61: #{tpu_custom_call.1} parent=47 // pred_check
          %p318 = pneg %p152
        $region62: #{tpu_custom_call.1} parent=47 // pred_check_branch
          %320 = sbr.rel (%p318) target = $region64
        $region63: #{tpu_custom_call.1} parent=47 // pred_region
          %322 = dma.done [#allocation9], 1024
        $region64: #{tpu_custom_call.1} parent=47 // pred_fallthru
          _
        %s323 = sand.u32 %s34, 1
        %s324 = scalar_lea.sflag [#allocation3], %s323
        %s325 = sand.u32 %s34, 1
        %s326 = smul.addr %s325, 256
        %s327 = scalar_lea.vmem [#allocation2], %s326
        %p328 = pneg %p47
        %p329 = pneg %p44
        %p330 = pneg %p68
        %p331 = pneg %p65
        %p332 = pneg %p89
        %p333 = pneg %p86
        %p334 = pneg %p110
        %p335 = pneg %p107
        %p336 = pneg %p131
        %p337 = pneg %p128
        %p338 = pneg %p152
        %p339 = pneg %p149
        %p340 = pneg %p173
        %p341 = pneg %p170
        %p342 = pneg %p199
        %p343 = pneg %p196
        %s344 = sand.u32 %s186, 1
        %s345 = scalar_lea.sflag [#allocation4], %s344
        %s346 = sand.u32 %s186, 1
        %s347 = smul.addr %s346, 512
        %s348 = scalar_lea.vmem [#allocation10], %s347
        %s349 = smul.u32 64, %s26
        %s350 = smul.u32 64, %s26
        %v351 = vld [vmem:[%s302] sm:$0xf]
        %v352 = vld [vmem:[%s302 + $0x4] sm:$0xf]
        %v353 = vld [vmem:[%s302 + $0x8] sm:$0xf]
        %v354 = vld [vmem:[%s302 + $0xc] sm:$0xf]
        %v355 = vld [vmem:[%s302 + $0x10] sm:$0xf]
        %v356 = vld [vmem:[%s302 + $0x14] sm:$0xf]
        %v357 = vld [vmem:[%s302 + $0x18] sm:$0xf]
        %v358 = vld [vmem:[%s302 + $0x1c] sm:$0xf]
        %v359 = vld [vmem:[%s302 + $0x20] sm:$0xf]
        %v360 = vld [vmem:[%s302 + $0x24] sm:$0xf]
        %v361 = vld [vmem:[%s302 + $0x28] sm:$0xf]
        %v362 = vld [vmem:[%s302 + $0x2c] sm:$0xf]
        %v363 = vld [vmem:[%s302 + $0x30] sm:$0xf]
        %v364 = vld [vmem:[%s302 + $0x34] sm:$0xf]
        %v365 = vld [vmem:[%s302 + $0x38] sm:$0xf]
        %v366 = vld [vmem:[%s302 + $0x3c] sm:$0xf]
        %v367 = vld [vmem:[%s302 + $0x40] sm:$0xf]
        %v368 = vld [vmem:[%s302 + $0x44] sm:$0xf]
        %v369 = vld [vmem:[%s302 + $0x48] sm:$0xf]
        %v370 = vld [vmem:[%s302 + $0x4c] sm:$0xf]
        %v371 = vld [vmem:[%s302 + $0x50] sm:$0xf]
        %v372 = vld [vmem:[%s302 + $0x54] sm:$0xf]
        %v373 = vld [vmem:[%s302 + $0x58] sm:$0xf]
        %v374 = vld [vmem:[%s302 + $0x5c] sm:$0xf]
        %v375 = vld [vmem:[%s302 + $0x60] sm:$0xf]
        %v376 = vld [vmem:[%s302 + $0x64] sm:$0xf]
        %v377 = vld [vmem:[%s302 + $0x68] sm:$0xf]
        %v378 = vld [vmem:[%s302 + $0x6c] sm:$0xf]
        %v379 = vld [vmem:[%s302 + $0x70] sm:$0xf]
        %v380 = vld [vmem:[%s302 + $0x74] sm:$0xf]
        %v381 = vld [vmem:[%s302 + $0x78] sm:$0xf]
        %v382 = vld [vmem:[%s302 + $0x7c] sm:$0xf]
        %v383 = vld [vmem:[%s302 + $0x80] sm:$0xf]
        %v384 = vld [vmem:[%s302 + $0x84] sm:$0xf]
        %v385 = vld [vmem:[%s302 + $0x88] sm:$0xf]
        %v386 = vld [vmem:[%s302 + $0x8c] sm:$0xf]
        %v387 = vld [vmem:[%s302 + $0x90] sm:$0xf]
        %v388 = vld [vmem:[%s302 + $0x94] sm:$0xf]
        %v389 = vld [vmem:[%s302 + $0x98] sm:$0xf]
        %v390 = vld [vmem:[%s302 + $0x9c] sm:$0xf]
        %v391 = vld [vmem:[%s302 + $0xa0] sm:$0xf]
        %v392 = vld [vmem:[%s302 + $0xa4] sm:$0xf]
        %v393 = vld [vmem:[%s302 + $0xa8] sm:$0xf]
        %v394 = vld [vmem:[%s302 + $0xac] sm:$0xf]
        %v395 = vld [vmem:[%s302 + $0xb0] sm:$0xf]
        %v396 = vld [vmem:[%s302 + $0xb4] sm:$0xf]
        %v397 = vld [vmem:[%s302 + $0xb8] sm:$0xf]
        %v398 = vld [vmem:[%s302 + $0xbc] sm:$0xf]
        %v399 = vld [vmem:[%s302 + $0xc0] sm:$0xf]
        %v400 = vld [vmem:[%s302 + $0xc4] sm:$0xf]
        %v401 = vld [vmem:[%s302 + $0xc8] sm:$0xf]
        %v402 = vld [vmem:[%s302 + $0xcc] sm:$0xf]
        %v403 = vld [vmem:[%s302 + $0xd0] sm:$0xf]
        %v404 = vld [vmem:[%s302 + $0xd4] sm:$0xf]
        %v405 = vld [vmem:[%s302 + $0xd8] sm:$0xf]
        %v406 = vld [vmem:[%s302 + $0xdc] sm:$0xf]
        %v407 = vld [vmem:[%s302 + $0xe0] sm:$0xf]
        %v408 = vld [vmem:[%s302 + $0xe4] sm:$0xf]
        %v409 = vld [vmem:[%s302 + $0xe8] sm:$0xf]
        %v410 = vld [vmem:[%s302 + $0xec] sm:$0xf]
        %v411 = vld [vmem:[%s302 + $0xf0] sm:$0xf]
        %v412 = vld [vmem:[%s302 + $0xf4] sm:$0xf]
        %v413 = vld [vmem:[%s302 + $0xf8] sm:$0xf]
        %v414 = vld [vmem:[%s302 + $0xfc] sm:$0xf]
        %v415 = vld [vmem:[#allocation5] sm:$0xf]
        %v416 = vld [vmem:[#allocation5 + $0x4] sm:$0xf]
        %v417 = vld [vmem:[#allocation5 + $0x8] sm:$0xf]
        %v418 = vld [vmem:[#allocation5 + $0xc] sm:$0xf]
        %v419 = vld [vmem:[#allocation5 + $0x10] sm:$0xf]
        %v420 = vld [vmem:[#allocation5 + $0x14] sm:$0xf]
        %v421 = vld [vmem:[#allocation5 + $0x18] sm:$0xf]
        %v422 = vld [vmem:[#allocation5 + $0x1c] sm:$0xf]
        %v423 = vld [vmem:[#allocation5 + $0x20] sm:$0xf]
        %v424 = vld [vmem:[#allocation5 + $0x24] sm:$0xf]
        %v425 = vld [vmem:[#allocation5 + $0x28] sm:$0xf]
        %v426 = vld [vmem:[#allocation5 + $0x2c] sm:$0xf]
        %v427 = vld [vmem:[#allocation5 + $0x30] sm:$0xf]
        %v428 = vld [vmem:[#allocation5 + $0x34] sm:$0xf]
        %v429 = vld [vmem:[#allocation5 + $0x38] sm:$0xf]
        %v430 = vld [vmem:[#allocation5 + $0x3c] sm:$0xf]
        %v431 = vld [vmem:[%s2] sm:$0x1]
        %v433 = vperm.slane %v431, 0
        %v499 = vunpack.c.l.b16 %v351
        %v500 = vunpack.c.l.b16 %v352
        %v501 = vunpack.c.l.b16 %v353
        %v502 = vunpack.c.l.b16 %v354
        %v503 = vunpack.c.l.b16 %v355
        %v504 = vunpack.c.l.b16 %v356
        %v505 = vunpack.c.l.b16 %v357
        %v506 = vunpack.c.l.b16 %v358
        %v507 = vunpack.c.l.b16 %v359
        %v508 = vunpack.c.l.b16 %v360
        %v509 = vunpack.c.l.b16 %v361
        %v510 = vunpack.c.l.b16 %v362
        %v511 = vunpack.c.l.b16 %v363
        %v512 = vunpack.c.l.b16 %v364
        %v513 = vunpack.c.l.b16 %v365
        %v514 = vunpack.c.l.b16 %v366
        %v515 = vunpack.c.l.b16 %v367
        %v516 = vunpack.c.l.b16 %v368
        %v517 = vunpack.c.l.b16 %v369
        %v518 = vunpack.c.l.b16 %v370
        %v519 = vunpack.c.l.b16 %v371
        %v520 = vunpack.c.l.b16 %v372
        %v521 = vunpack.c.l.b16 %v373
        %v522 = vunpack.c.l.b16 %v374
        %v523 = vunpack.c.l.b16 %v375
        %v524 = vunpack.c.l.b16 %v376
        %v525 = vunpack.c.l.b16 %v377
        %v526 = vunpack.c.l.b16 %v378
        %v527 = vunpack.c.l.b16 %v379
        %v528 = vunpack.c.l.b16 %v380
        %v529 = vunpack.c.l.b16 %v381
        %v530 = vunpack.c.l.b16 %v382
        %v531 = vunpack.c.l.b16 %v383
        %v532 = vunpack.c.l.b16 %v384
        %v533 = vunpack.c.l.b16 %v385
        %v534 = vunpack.c.l.b16 %v386
        %v535 = vunpack.c.l.b16 %v387
        %v536 = vunpack.c.l.b16 %v388
        %v537 = vunpack.c.l.b16 %v389
        %v538 = vunpack.c.l.b16 %v390
        %v539 = vunpack.c.l.b16 %v391
        %v540 = vunpack.c.l.b16 %v392
        %v541 = vunpack.c.l.b16 %v393
        %v542 = vunpack.c.l.b16 %v394
        %v543 = vunpack.c.l.b16 %v395
        %v544 = vunpack.c.l.b16 %v396
        %v545 = vunpack.c.l.b16 %v397
        %v546 = vunpack.c.l.b16 %v398
        %v547 = vunpack.c.l.b16 %v399
        %v548 = vunpack.c.l.b16 %v400
        %v549 = vunpack.c.l.b16 %v401
        %v550 = vunpack.c.l.b16 %v402
        %v551 = vunpack.c.l.b16 %v403
        %v552 = vunpack.c.l.b16 %v404
        %v553 = vunpack.c.l.b16 %v405
        %v554 = vunpack.c.l.b16 %v406
        %v555 = vunpack.c.l.b16 %v407
        %v556 = vunpack.c.l.b16 %v408
        %v557 = vunpack.c.l.b16 %v409
        %v558 = vunpack.c.l.b16 %v410
        %v559 = vunpack.c.l.b16 %v411
        %v560 = vunpack.c.l.b16 %v412
        %v561 = vunpack.c.l.b16 %v413
        %v562 = vunpack.c.l.b16 %v414
        %v563 = vpack.c.b16 %v500, %v499
        %v564 = vpack.c.b16 %v502, %v501
        %v565 = vpack.c.b16 %v504, %v503
        %v566 = vpack.c.b16 %v506, %v505
        %v567 = vpack.c.b16 %v508, %v507
        %v568 = vpack.c.b16 %v510, %v509
        %v569 = vpack.c.b16 %v512, %v511
        %v570 = vpack.c.b16 %v514, %v513
        %v571 = vpack.c.b16 %v516, %v515
        %v572 = vpack.c.b16 %v518, %v517
        %v573 = vpack.c.b16 %v520, %v519
        %v574 = vpack.c.b16 %v522, %v521
        %v575 = vpack.c.b16 %v524, %v523
        %v576 = vpack.c.b16 %v526, %v525
        %v577 = vpack.c.b16 %v528, %v527
        %v578 = vpack.c.b16 %v530, %v529
        %v579 = vpack.c.b16 %v532, %v531
        %v580 = vpack.c.b16 %v534, %v533
        %v581 = vpack.c.b16 %v536, %v535
        %v582 = vpack.c.b16 %v538, %v537
        %v583 = vpack.c.b16 %v540, %v539
        %v584 = vpack.c.b16 %v542, %v541
        %v585 = vpack.c.b16 %v544, %v543
        %v586 = vpack.c.b16 %v546, %v545
        %v587 = vpack.c.b16 %v548, %v547
        %v588 = vpack.c.b16 %v550, %v549
        %v589 = vpack.c.b16 %v552, %v551
        %v590 = vpack.c.b16 %v554, %v553
        %v591 = vpack.c.b16 %v556, %v555
        %v592 = vpack.c.b16 %v558, %v557
        %v593 = vpack.c.b16 %v560, %v559
        %v594 = vpack.c.b16 %v562, %v561
        %v643 = vunpack.c.l.b16 %v415
        %v644 = vunpack.c.l.b16 %v416
        %v645 = vunpack.c.l.b16 %v417
        %v646 = vunpack.c.l.b16 %v418
        %v647 = vunpack.c.l.b16 %v419
        %v648 = vunpack.c.l.b16 %v420
        %v649 = vunpack.c.l.b16 %v421
        %v650 = vunpack.c.l.b16 %v422
        %v651 = vunpack.c.l.b16 %v423
        %v652 = vunpack.c.l.b16 %v424
        %v653 = vunpack.c.l.b16 %v425
        %v654 = vunpack.c.l.b16 %v426
        %v655 = vunpack.c.l.b16 %v427
        %v656 = vunpack.c.l.b16 %v428
        %v657 = vunpack.c.l.b16 %v429
        %v658 = vunpack.c.l.b16 %v430
        %v659 = vpack.c.b16 %v644, %v643
        %v660 = vpack.c.b16 %v646, %v645
        %v661 = vpack.c.b16 %v648, %v647
        %v662 = vpack.c.b16 %v650, %v649
        %v663 = vpack.c.b16 %v652, %v651
        %v664 = vpack.c.b16 %v654, %v653
        %v665 = vpack.c.b16 %v656, %v655
        %v666 = vpack.c.b16 %v658, %v657
        %675 = vmatpush.bf16.msra.mxu0 %v666
        %676 = vmatpush.bf16.msra.mxu0 %v665
        %677 = vmatpush.bf16.msra.mxu0 %v664
        %678 = vmatpush.bf16.msra.mxu0 %v663
        %679 = vmatpush.bf16.msra.mxu0 %v662
        %680 = vmatpush.bf16.msra.mxu0 %v661
        %681 = vmatpush.bf16.msra.mxu0 %v660
        %682 = vmatpush.bf16.msra.mxu0 %v659
        %683 = vmatmul.bf16.gmra.mxu0 %v563
        %v684 = vpop.f32.mrf.mxu0
        %v685 = vadd.f32 %v433, %v684
        %v686 = vpop.f32.mrf.mxu0
        %v687 = vadd.f32 %v433, %v686
        %688 = vmatmul.bf16.gmra.mxu0 %v564
        %v689 = vpop.f32.mrf.mxu0
        %v690 = vadd.f32 %v433, %v689
        %v691 = vpop.f32.mrf.mxu0
        %v692 = vadd.f32 %v433, %v691
        %693 = vmatmul.bf16.gmra.mxu0 %v565
        %v694 = vpop.f32.mrf.mxu0
        %v695 = vadd.f32 %v433, %v694
        %v696 = vpop.f32.mrf.mxu0
        %v697 = vadd.f32 %v433, %v696
        %698 = vmatmul.bf16.gmra.mxu0 %v566
        %v699 = vpop.f32.mrf.mxu0
        %v700 = vadd.f32 %v433, %v699
        %v701 = vpop.f32.mrf.mxu0
        %v702 = vadd.f32 %v433, %v701
        %703 = vmatmul.bf16.gmra.mxu0 %v567
        %v704 = vpop.f32.mrf.mxu0
        %v705 = vadd.f32 %v433, %v704
        %v706 = vpop.f32.mrf.mxu0
        %v707 = vadd.f32 %v433, %v706
        %708 = vmatmul.bf16.gmra.mxu0 %v568
        %v709 = vpop.f32.mrf.mxu0
        %v710 = vadd.f32 %v433, %v709
        %v711 = vpop.f32.mrf.mxu0
        %v712 = vadd.f32 %v433, %v711
        %713 = vmatmul.bf16.gmra.mxu0 %v569
        %v714 = vpop.f32.mrf.mxu0
        %v715 = vadd.f32 %v433, %v714
        %v716 = vpop.f32.mrf.mxu0
        %v717 = vadd.f32 %v433, %v716
        %718 = vmatmul.bf16.gmra.mxu0 %v570
        %v719 = vpop.f32.mrf.mxu0
        %v720 = vadd.f32 %v433, %v719
        %v721 = vpop.f32.mrf.mxu0
        %v722 = vadd.f32 %v433, %v721
        %723 = vmatmul.bf16.gmra.mxu0 %v571
        %v724 = vpop.f32.mrf.mxu0
        %v725 = vadd.f32 %v433, %v724
        %v726 = vpop.f32.mrf.mxu0
        %v727 = vadd.f32 %v433, %v726
        %728 = vmatmul.bf16.gmra.mxu0 %v572
        %v729 = vpop.f32.mrf.mxu0
        %v730 = vadd.f32 %v433, %v729
        %v731 = vpop.f32.mrf.mxu0
        %v732 = vadd.f32 %v433, %v731
        %733 = vmatmul.bf16.gmra.mxu0 %v573
        %v734 = vpop.f32.mrf.mxu0
        %v735 = vadd.f32 %v433, %v734
        %v736 = vpop.f32.mrf.mxu0
        %v737 = vadd.f32 %v433, %v736
        %738 = vmatmul.bf16.gmra.mxu0 %v574
        %v739 = vpop.f32.mrf.mxu0
        %v740 = vadd.f32 %v433, %v739
        %v741 = vpop.f32.mrf.mxu0
        %v742 = vadd.f32 %v433, %v741
        %743 = vmatmul.bf16.gmra.mxu0 %v575
        %v744 = vpop.f32.mrf.mxu0
        %v745 = vadd.f32 %v433, %v744
        %v746 = vpop.f32.mrf.mxu0
        %v747 = vadd.f32 %v433, %v746
        %748 = vmatmul.bf16.gmra.mxu0 %v576
        %v749 = vpop.f32.mrf.mxu0
        %v750 = vadd.f32 %v433, %v749
        %v751 = vpop.f32.mrf.mxu0
        %v752 = vadd.f32 %v433, %v751
        %753 = vmatmul.bf16.gmra.mxu0 %v577
        %v754 = vpop.f32.mrf.mxu0
        %v755 = vadd.f32 %v433, %v754
        %v756 = vpop.f32.mrf.mxu0
        %v757 = vadd.f32 %v433, %v756
        %758 = vmatmul.bf16.gmra.mxu0 %v578
        %v759 = vpop.f32.mrf.mxu0
        %v760 = vadd.f32 %v433, %v759
        %v761 = vpop.f32.mrf.mxu0
        %v762 = vadd.f32 %v433, %v761
        %763 = vmatmul.bf16.gmra.mxu0 %v579
        %v764 = vpop.f32.mrf.mxu0
        %v765 = vadd.f32 %v433, %v764
        %v766 = vpop.f32.mrf.mxu0
        %v767 = vadd.f32 %v433, %v766
        %768 = vmatmul.bf16.gmra.mxu0 %v580
        %v769 = vpop.f32.mrf.mxu0
        %v770 = vadd.f32 %v433, %v769
        %v771 = vpop.f32.mrf.mxu0
        %v772 = vadd.f32 %v433, %v771
        %773 = vmatmul.bf16.gmra.mxu0 %v581
        %v774 = vpop.f32.mrf.mxu0
        %v775 = vadd.f32 %v433, %v774
        %v776 = vpop.f32.mrf.mxu0
        %v777 = vadd.f32 %v433, %v776
        %778 = vmatmul.bf16.gmra.mxu0 %v582
        %v779 = vpop.f32.mrf.mxu0
        %v780 = vadd.f32 %v433, %v779
        %v781 = vpop.f32.mrf.mxu0
        %v782 = vadd.f32 %v433, %v781
        %783 = vmatmul.bf16.gmra.mxu0 %v583
        %v784 = vpop.f32.mrf.mxu0
        %v785 = vadd.f32 %v433, %v784
        %v786 = vpop.f32.mrf.mxu0
        %v787 = vadd.f32 %v433, %v786
        %788 = vmatmul.bf16.gmra.mxu0 %v584
        %v789 = vpop.f32.mrf.mxu0
        %v790 = vadd.f32 %v433, %v789
        %v791 = vpop.f32.mrf.mxu0
        %v792 = vadd.f32 %v433, %v791
        %793 = vmatmul.bf16.gmra.mxu0 %v585
        %v794 = vpop.f32.mrf.mxu0
        %v795 = vadd.f32 %v433, %v794
        %v796 = vpop.f32.mrf.mxu0
        %v797 = vadd.f32 %v433, %v796
        %798 = vmatmul.bf16.gmra.mxu0 %v586
        %v799 = vpop.f32.mrf.mxu0
        %v800 = vadd.f32 %v433, %v799
        %v801 = vpop.f32.mrf.mxu0
        %v802 = vadd.f32 %v433, %v801
        %803 = vmatmul.bf16.gmra.mxu0 %v587
        %v804 = vpop.f32.mrf.mxu0
        %v805 = vadd.f32 %v433, %v804
        %v806 = vpop.f32.mrf.mxu0
        %v807 = vadd.f32 %v433, %v806
        %808 = vmatmul.bf16.gmra.mxu0 %v588
        %v809 = vpop.f32.mrf.mxu0
        %v810 = vadd.f32 %v433, %v809
        %v811 = vpop.f32.mrf.mxu0
        %v812 = vadd.f32 %v433, %v811
        %813 = vmatmul.bf16.gmra.mxu0 %v589
        %v814 = vpop.f32.mrf.mxu0
        %v815 = vadd.f32 %v433, %v814
        %v816 = vpop.f32.mrf.mxu0
        %v817 = vadd.f32 %v433, %v816
        %818 = vmatmul.bf16.gmra.mxu0 %v590
        %v819 = vpop.f32.mrf.mxu0
        %v820 = vadd.f32 %v433, %v819
        %v821 = vpop.f32.mrf.mxu0
        %v822 = vadd.f32 %v433, %v821
        %823 = vmatmul.bf16.gmra.mxu0 %v591
        %v824 = vpop.f32.mrf.mxu0
        %v825 = vadd.f32 %v433, %v824
        %v826 = vpop.f32.mrf.mxu0
        %v827 = vadd.f32 %v433, %v826
        %828 = vmatmul.bf16.gmra.mxu0 %v592
        %v829 = vpop.f32.mrf.mxu0
        %v830 = vadd.f32 %v433, %v829
        %v831 = vpop.f32.mrf.mxu0
        %v832 = vadd.f32 %v433, %v831
        %833 = vmatmul.bf16.gmra.mxu0 %v593
        %v834 = vpop.f32.mrf.mxu0
        %v835 = vadd.f32 %v433, %v834
        %v836 = vpop.f32.mrf.mxu0
        %v837 = vadd.f32 %v433, %v836
        %838 = vmatmul.bf16.gmra.mxu0 %v594
        %v839 = vpop.f32.mrf.mxu0
        %v840 = vadd.f32 %v433, %v839
        %v841 = vpop.f32.mrf.mxu0
        %v842 = vadd.f32 %v433, %v841
        %843 = vdwg.mxu0
        %v844 = vmin.f32 %v685, 0.0
        %v845 = vmin.f32 %v687, 0.0
        %v846 = vmin.f32 %v690, 0.0
        %v847 = vmin.f32 %v692, 0.0
        %v848 = vmin.f32 %v695, 0.0
        %v849 = vmin.f32 %v697, 0.0
        %v850 = vmin.f32 %v700, 0.0
        %v851 = vmin.f32 %v702, 0.0
        %v852 = vmin.f32 %v705, 0.0
        %v853 = vmin.f32 %v707, 0.0
        %v854 = vmin.f32 %v710, 0.0
        %v855 = vmin.f32 %v712, 0.0
        %v856 = vmin.f32 %v715, 0.0
        %v857 = vmin.f32 %v717, 0.0
        %v858 = vmin.f32 %v720, 0.0
        %v859 = vmin.f32 %v722, 0.0
        %v860 = vmin.f32 %v725, 0.0
        %v861 = vmin.f32 %v727, 0.0
        %v862 = vmin.f32 %v730, 0.0
        %v863 = vmin.f32 %v732, 0.0
        %v864 = vmin.f32 %v735, 0.0
        %v865 = vmin.f32 %v737, 0.0
        %v866 = vmin.f32 %v740, 0.0
        %v867 = vmin.f32 %v742, 0.0
        %v868 = vmin.f32 %v745, 0.0
        %v869 = vmin.f32 %v747, 0.0
        %v870 = vmin.f32 %v750, 0.0
        %v871 = vmin.f32 %v752, 0.0
        %v872 = vmin.f32 %v755, 0.0
        %v873 = vmin.f32 %v757, 0.0
        %v874 = vmin.f32 %v760, 0.0
        %v875 = vmin.f32 %v762, 0.0
        %v876 = vmin.f32 %v765, 0.0
        %v877 = vmin.f32 %v767, 0.0
        %v878 = vmin.f32 %v770, 0.0
        %v879 = vmin.f32 %v772, 0.0
        %v880 = vmin.f32 %v775, 0.0
        %v881 = vmin.f32 %v777, 0.0
        %v882 = vmin.f32 %v780, 0.0
        %v883 = vmin.f32 %v782, 0.0
        %v884 = vmin.f32 %v785, 0.0
        %v885 = vmin.f32 %v787, 0.0
        %v886 = vmin.f32 %v790, 0.0
        %v887 = vmin.f32 %v792, 0.0
        %v888 = vmin.f32 %v795, 0.0
        %v889 = vmin.f32 %v797, 0.0
        %v890 = vmin.f32 %v800, 0.0
        %v891 = vmin.f32 %v802, 0.0
        %v892 = vmin.f32 %v805, 0.0
        %v893 = vmin.f32 %v807, 0.0
        %v894 = vmin.f32 %v810, 0.0
        %v895 = vmin.f32 %v812, 0.0
        %v896 = vmin.f32 %v815, 0.0
        %v897 = vmin.f32 %v817, 0.0
        %v898 = vmin.f32 %v820, 0.0
        %v899 = vmin.f32 %v822, 0.0
        %v900 = vmin.f32 %v825, 0.0
        %v901 = vmin.f32 %v827, 0.0
        %v902 = vmin.f32 %v830, 0.0
        %v903 = vmin.f32 %v832, 0.0
        %v904 = vmin.f32 %v835, 0.0
        %v905 = vmin.f32 %v837, 0.0
        %v906 = vmin.f32 %v840, 0.0
        %v907 = vmin.f32 %v842, 0.0
        %v908 = vmul.f32 %v844, 10.0
        %v909 = vmul.f32 %v845, 10.0
        %v910 = vmul.f32 %v846, 10.0
        %v911 = vmul.f32 %v847, 10.0
        %v912 = vmul.f32 %v848, 10.0
        %v913 = vmul.f32 %v849, 10.0
        %v914 = vmul.f32 %v850, 10.0
        %v915 = vmul.f32 %v851, 10.0
        %v916 = vmul.f32 %v852, 10.0
        %v917 = vmul.f32 %v853, 10.0
        %v918 = vmul.f32 %v854, 10.0
        %v919 = vmul.f32 %v855, 10.0
        %v920 = vmul.f32 %v856, 10.0
        %v921 = vmul.f32 %v857, 10.0
        %v922 = vmul.f32 %v858, 10.0
        %v923 = vmul.f32 %v859, 10.0
        %v924 = vmul.f32 %v860, 10.0
        %v925 = vmul.f32 %v861, 10.0
        %v926 = vmul.f32 %v862, 10.0
        %v927 = vmul.f32 %v863, 10.0
        %v928 = vmul.f32 %v864, 10.0
        %v929 = vmul.f32 %v865, 10.0
        %v930 = vmul.f32 %v866, 10.0
        %v931 = vmul.f32 %v867, 10.0
        %v932 = vmul.f32 %v868, 10.0
        %v933 = vmul.f32 %v869, 10.0
        %v934 = vmul.f32 %v870, 10.0
        %v935 = vmul.f32 %v871, 10.0
        %v936 = vmul.f32 %v872, 10.0
        %v937 = vmul.f32 %v873, 10.0
        %v938 = vmul.f32 %v874, 10.0
        %v939 = vmul.f32 %v875, 10.0
        %v940 = vmul.f32 %v876, 10.0
        %v941 = vmul.f32 %v877, 10.0
        %v942 = vmul.f32 %v878, 10.0
        %v943 = vmul.f32 %v879, 10.0
        %v944 = vmul.f32 %v880, 10.0
        %v945 = vmul.f32 %v881, 10.0
        %v946 = vmul.f32 %v882, 10.0
        %v947 = vmul.f32 %v883, 10.0
        %v948 = vmul.f32 %v884, 10.0
        %v949 = vmul.f32 %v885, 10.0
        %v950 = vmul.f32 %v886, 10.0
        %v951 = vmul.f32 %v887, 10.0
        %v952 = vmul.f32 %v888, 10.0
        %v953 = vmul.f32 %v889, 10.0
        %v954 = vmul.f32 %v890, 10.0
        %v955 = vmul.f32 %v891, 10.0
        %v956 = vmul.f32 %v892, 10.0
        %v957 = vmul.f32 %v893, 10.0
        %v958 = vmul.f32 %v894, 10.0
        %v959 = vmul.f32 %v895, 10.0
        %v960 = vmul.f32 %v896, 10.0
        %v961 = vmul.f32 %v897, 10.0
        %v962 = vmul.f32 %v898, 10.0
        %v963 = vmul.f32 %v899, 10.0
        %v964 = vmul.f32 %v900, 10.0
        %v965 = vmul.f32 %v901, 10.0
        %v966 = vmul.f32 %v902, 10.0
        %v967 = vmul.f32 %v903, 10.0
        %v968 = vmul.f32 %v904, 10.0
        %v969 = vmul.f32 %v905, 10.0
        %v970 = vmul.f32 %v906, 10.0
        %v971 = vmul.f32 %v907, 10.0
        %v972 = vmul.f32 %v908, 1.442695
        %v973 = vpow.pop %v972
        %v974 = vmul.f32 %v909, 1.442695
        %v975 = vpow.pop %v974
        %v976 = vmul.f32 %v910, 1.442695
        %v977 = vpow.pop %v976
        %v978 = vmul.f32 %v911, 1.442695
        %v979 = vpow.pop %v978
        %v980 = vmul.f32 %v912, 1.442695
        %v981 = vpow.pop %v980
        %v982 = vmul.f32 %v913, 1.442695
        %v983 = vpow.pop %v982
        %v984 = vmul.f32 %v914, 1.442695
        %v985 = vpow.pop %v984
        %v986 = vmul.f32 %v915, 1.442695
        %v987 = vpow.pop %v986
        %v988 = vmul.f32 %v916, 1.442695
        %v989 = vpow.pop %v988
        %v990 = vmul.f32 %v917, 1.442695
        %v991 = vpow.pop %v990
        %v992 = vmul.f32 %v918, 1.442695
        %v993 = vpow.pop %v992
        %v994 = vmul.f32 %v919, 1.442695
        %v995 = vpow.pop %v994
        %v996 = vmul.f32 %v920, 1.442695
        %v997 = vpow.pop %v996
        %v998 = vmul.f32 %v921, 1.442695
        %v999 = vpow.pop %v998
        %v1000 = vmul.f32 %v922, 1.442695
        %v1001 = vpow.pop %v1000
        %v1002 = vmul.f32 %v923, 1.442695
        %v1003 = vpow.pop %v1002
        %v1004 = vmul.f32 %v924, 1.442695
        %v1005 = vpow.pop %v1004
        %v1006 = vmul.f32 %v925, 1.442695
        %v1007 = vpow.pop %v1006
        %v1008 = vmul.f32 %v926, 1.442695
        %v1009 = vpow.pop %v1008
        %v1010 = vmul.f32 %v927, 1.442695
        %v1011 = vpow.pop %v1010
        %v1012 = vmul.f32 %v928, 1.442695
        %v1013 = vpow.pop %v1012
        %v1014 = vmul.f32 %v929, 1.442695
        %v1015 = vpow.pop %v1014
        %v1016 = vmul.f32 %v930, 1.442695
        %v1017 = vpow.pop %v1016
        %v1018 = vmul.f32 %v931, 1.442695
        %v1019 = vpow.pop %v1018
        %v1020 = vmul.f32 %v932, 1.442695
        %v1021 = vpow.pop %v1020
        %v1022 = vmul.f32 %v933, 1.442695
        %v1023 = vpow.pop %v1022
        %v1024 = vmul.f32 %v934, 1.442695
        %v1025 = vpow.pop %v1024
        %v1026 = vmul.f32 %v935, 1.442695
        %v1027 = vpow.pop %v1026
        %v1028 = vmul.f32 %v936, 1.442695
        %v1029 = vpow.pop %v1028
        %v1030 = vmul.f32 %v937, 1.442695
        %v1031 = vpow.pop %v1030
        %v1032 = vmul.f32 %v938, 1.442695
        %v1033 = vpow.pop %v1032
        %v1034 = vmul.f32 %v939, 1.442695
        %v1035 = vpow.pop %v1034
        %v1036 = vmul.f32 %v940, 1.442695
        %v1037 = vpow.pop %v1036
        %v1038 = vmul.f32 %v941, 1.442695
        %v1039 = vpow.pop %v1038
        %v1040 = vmul.f32 %v942, 1.442695
        %v1041 = vpow.pop %v1040
        %v1042 = vmul.f32 %v943, 1.442695
        %v1043 = vpow.pop %v1042
        %v1044 = vmul.f32 %v944, 1.442695
        %v1045 = vpow.pop %v1044
        %v1046 = vmul.f32 %v945, 1.442695
        %v1047 = vpow.pop %v1046
        %v1048 = vmul.f32 %v946, 1.442695
        %v1049 = vpow.pop %v1048
        %v1050 = vmul.f32 %v947, 1.442695
        %v1051 = vpow.pop %v1050
        %v1052 = vmul.f32 %v948, 1.442695
        %v1053 = vpow.pop %v1052
        %v1054 = vmul.f32 %v949, 1.442695
        %v1055 = vpow.pop %v1054
        %v1056 = vmul.f32 %v950, 1.442695
        %v1057 = vpow.pop %v1056
        %v1058 = vmul.f32 %v951, 1.442695
        %v1059 = vpow.pop %v1058
        %v1060 = vmul.f32 %v952, 1.442695
        %v1061 = vpow.pop %v1060
        %v1062 = vmul.f32 %v953, 1.442695
        %v1063 = vpow.pop %v1062
        %v1064 = vmul.f32 %v954, 1.442695
        %v1065 = vpow.pop %v1064
        %v1066 = vmul.f32 %v955, 1.442695
        %v1067 = vpow.pop %v1066
        %v1068 = vmul.f32 %v956, 1.442695
        %v1069 = vpow.pop %v1068
        %v1070 = vmul.f32 %v957, 1.442695
        %v1071 = vpow.pop %v1070
        %v1072 = vmul.f32 %v958, 1.442695
        %v1073 = vpow.pop %v1072
        %v1074 = vmul.f32 %v959, 1.442695
        %v1075 = vpow.pop %v1074
        %v1076 = vmul.f32 %v960, 1.442695
        %v1077 = vpow.pop %v1076
        %v1078 = vmul.f32 %v961, 1.442695
        %v1079 = vpow.pop %v1078
        %v1080 = vmul.f32 %v962, 1.442695
        %v1081 = vpow.pop %v1080
        %v1082 = vmul.f32 %v963, 1.442695
        %v1083 = vpow.pop %v1082
        %v1084 = vmul.f32 %v964, 1.442695
        %v1085 = vpow.pop %v1084
        %v1086 = vmul.f32 %v965, 1.442695
        %v1087 = vpow.pop %v1086
        %v1088 = vmul.f32 %v966, 1.442695
        %v1089 = vpow.pop %v1088
        %v1090 = vmul.f32 %v967, 1.442695
        %v1091 = vpow.pop %v1090
        %v1092 = vmul.f32 %v968, 1.442695
        %v1093 = vpow.pop %v1092
        %v1094 = vmul.f32 %v969, 1.442695
        %v1095 = vpow.pop %v1094
        %v1096 = vmul.f32 %v970, 1.442695
        %v1097 = vpow.pop %v1096
        %v1098 = vmul.f32 %v971, 1.442695
        %v1099 = vpow.pop %v1098
        %v1100 = vsub.f32 %v973, 1.0
        %v1101 = vsub.f32 %v975, 1.0
        %v1102 = vsub.f32 %v977, 1.0
        %v1103 = vsub.f32 %v979, 1.0
        %v1104 = vsub.f32 %v981, 1.0
        %v1105 = vsub.f32 %v983, 1.0
        %v1106 = vsub.f32 %v985, 1.0
        %v1107 = vsub.f32 %v987, 1.0
        %v1108 = vsub.f32 %v989, 1.0
        %v1109 = vsub.f32 %v991, 1.0
        %v1110 = vsub.f32 %v993, 1.0
        %v1111 = vsub.f32 %v995, 1.0
        %v1112 = vsub.f32 %v997, 1.0
        %v1113 = vsub.f32 %v999, 1.0
        %v1114 = vsub.f32 %v1001, 1.0
        %v1115 = vsub.f32 %v1003, 1.0
        %v1116 = vsub.f32 %v1005, 1.0
        %v1117 = vsub.f32 %v1007, 1.0
        %v1118 = vsub.f32 %v1009, 1.0
        %v1119 = vsub.f32 %v1011, 1.0
        %v1120 = vsub.f32 %v1013, 1.0
        %v1121 = vsub.f32 %v1015, 1.0
        %v1122 = vsub.f32 %v1017, 1.0
        %v1123 = vsub.f32 %v1019, 1.0
        %v1124 = vsub.f32 %v1021, 1.0
        %v1125 = vsub.f32 %v1023, 1.0
        %v1126 = vsub.f32 %v1025, 1.0
        %v1127 = vsub.f32 %v1027, 1.0
        %v1128 = vsub.f32 %v1029, 1.0
        %v1129 = vsub.f32 %v1031, 1.0
        %v1130 = vsub.f32 %v1033, 1.0
        %v1131 = vsub.f32 %v1035, 1.0
        %v1132 = vsub.f32 %v1037, 1.0
        %v1133 = vsub.f32 %v1039, 1.0
        %v1134 = vsub.f32 %v1041, 1.0
        %v1135 = vsub.f32 %v1043, 1.0
        %v1136 = vsub.f32 %v1045, 1.0
        %v1137 = vsub.f32 %v1047, 1.0
        %v1138 = vsub.f32 %v1049, 1.0
        %v1139 = vsub.f32 %v1051, 1.0
        %v1140 = vsub.f32 %v1053, 1.0
        %v1141 = vsub.f32 %v1055, 1.0
        %v1142 = vsub.f32 %v1057, 1.0
        %v1143 = vsub.f32 %v1059, 1.0
        %v1144 = vsub.f32 %v1061, 1.0
        %v1145 = vsub.f32 %v1063, 1.0
        %v1146 = vsub.f32 %v1065, 1.0
        %v1147 = vsub.f32 %v1067, 1.0
        %v1148 = vsub.f32 %v1069, 1.0
        %v1149 = vsub.f32 %v1071, 1.0
        %v1150 = vsub.f32 %v1073, 1.0
        %v1151 = vsub.f32 %v1075, 1.0
        %v1152 = vsub.f32 %v1077, 1.0
        %v1153 = vsub.f32 %v1079, 1.0
        %v1154 = vsub.f32 %v1081, 1.0
        %v1155 = vsub.f32 %v1083, 1.0
        %v1156 = vsub.f32 %v1085, 1.0
        %v1157 = vsub.f32 %v1087, 1.0
        %v1158 = vsub.f32 %v1089, 1.0
        %v1159 = vsub.f32 %v1091, 1.0
        %v1160 = vsub.f32 %v1093, 1.0
        %v1161 = vsub.f32 %v1095, 1.0
        %v1162 = vsub.f32 %v1097, 1.0
        %v1163 = vsub.f32 %v1099, 1.0
        %v1164 = vmul.f32 %v1100, 0.1
        %v1165 = vmul.f32 %v1101, 0.1
        %v1166 = vmul.f32 %v1102, 0.1
        %v1167 = vmul.f32 %v1103, 0.1
        %v1168 = vmul.f32 %v1104, 0.1
        %v1169 = vmul.f32 %v1105, 0.1
        %v1170 = vmul.f32 %v1106, 0.1
        %v1171 = vmul.f32 %v1107, 0.1
        %v1172 = vmul.f32 %v1108, 0.1
        %v1173 = vmul.f32 %v1109, 0.1
        %v1174 = vmul.f32 %v1110, 0.1
        %v1175 = vmul.f32 %v1111, 0.1
        %v1176 = vmul.f32 %v1112, 0.1
        %v1177 = vmul.f32 %v1113, 0.1
        %v1178 = vmul.f32 %v1114, 0.1
        %v1179 = vmul.f32 %v1115, 0.1
        %v1180 = vmul.f32 %v1116, 0.1
        %v1181 = vmul.f32 %v1117, 0.1
        %v1182 = vmul.f32 %v1118, 0.1
        %v1183 = vmul.f32 %v1119, 0.1
        %v1184 = vmul.f32 %v1120, 0.1
        %v1185 = vmul.f32 %v1121, 0.1
        %v1186 = vmul.f32 %v1122, 0.1
        %v1187 = vmul.f32 %v1123, 0.1
        %v1188 = vmul.f32 %v1124, 0.1
        %v1189 = vmul.f32 %v1125, 0.1
        %v1190 = vmul.f32 %v1126, 0.1
        %v1191 = vmul.f32 %v1127, 0.1
        %v1192 = vmul.f32 %v1128, 0.1
        %v1193 = vmul.f32 %v1129, 0.1
        %v1194 = vmul.f32 %v1130, 0.1
        %v1195 = vmul.f32 %v1131, 0.1
        %v1196 = vmul.f32 %v1132, 0.1
        %v1197 = vmul.f32 %v1133, 0.1
        %v1198 = vmul.f32 %v1134, 0.1
        %v1199 = vmul.f32 %v1135, 0.1
        %v1200 = vmul.f32 %v1136, 0.1
        %v1201 = vmul.f32 %v1137, 0.1
        %v1202 = vmul.f32 %v1138, 0.1
        %v1203 = vmul.f32 %v1139, 0.1
        %v1204 = vmul.f32 %v1140, 0.1
        %v1205 = vmul.f32 %v1141, 0.1
        %v1206 = vmul.f32 %v1142, 0.1
        %v1207 = vmul.f32 %v1143, 0.1
        %v1208 = vmul.f32 %v1144, 0.1
        %v1209 = vmul.f32 %v1145, 0.1
        %v1210 = vmul.f32 %v1146, 0.1
        %v1211 = vmul.f32 %v1147, 0.1
        %v1212 = vmul.f32 %v1148, 0.1
        %v1213 = vmul.f32 %v1149, 0.1
        %v1214 = vmul.f32 %v1150, 0.1
        %v1215 = vmul.f32 %v1151, 0.1
        %v1216 = vmul.f32 %v1152, 0.1
        %v1217 = vmul.f32 %v1153, 0.1
        %v1218 = vmul.f32 %v1154, 0.1
        %v1219 = vmul.f32 %v1155, 0.1
        %v1220 = vmul.f32 %v1156, 0.1
        %v1221 = vmul.f32 %v1157, 0.1
        %v1222 = vmul.f32 %v1158, 0.1
        %v1223 = vmul.f32 %v1159, 0.1
        %v1224 = vmul.f32 %v1160, 0.1
        %v1225 = vmul.f32 %v1161, 0.1
        %v1226 = vmul.f32 %v1162, 0.1
        %v1227 = vmul.f32 %v1163, 0.1
        %vm1228 = vcmp.gt.f32.partialorder %v685, 0.0
        %vm1229 = vcmp.gt.f32.partialorder %v687, 0.0
        %vm1230 = vcmp.gt.f32.partialorder %v690, 0.0
        %vm1231 = vcmp.gt.f32.partialorder %v692, 0.0
        %vm1232 = vcmp.gt.f32.partialorder %v695, 0.0
        %vm1233 = vcmp.gt.f32.partialorder %v697, 0.0
        %vm1234 = vcmp.gt.f32.partialorder %v700, 0.0
        %vm1235 = vcmp.gt.f32.partialorder %v702, 0.0
        %vm1236 = vcmp.gt.f32.partialorder %v705, 0.0
        %vm1237 = vcmp.gt.f32.partialorder %v707, 0.0
        %vm1238 = vcmp.gt.f32.partialorder %v710, 0.0
        %vm1239 = vcmp.gt.f32.partialorder %v712, 0.0
        %vm1240 = vcmp.gt.f32.partialorder %v715, 0.0
        %vm1241 = vcmp.gt.f32.partialorder %v717, 0.0
        %vm1242 = vcmp.gt.f32.partialorder %v720, 0.0
        %vm1243 = vcmp.gt.f32.partialorder %v722, 0.0
        %vm1244 = vcmp.gt.f32.partialorder %v725, 0.0
        %vm1245 = vcmp.gt.f32.partialorder %v727, 0.0
        %vm1246 = vcmp.gt.f32.partialorder %v730, 0.0
        %vm1247 = vcmp.gt.f32.partialorder %v732, 0.0
        %vm1248 = vcmp.gt.f32.partialorder %v735, 0.0
        %vm1249 = vcmp.gt.f32.partialorder %v737, 0.0
        %vm1250 = vcmp.gt.f32.partialorder %v740, 0.0
        %vm1251 = vcmp.gt.f32.partialorder %v742, 0.0
        %vm1252 = vcmp.gt.f32.partialorder %v745, 0.0
        %vm1253 = vcmp.gt.f32.partialorder %v747, 0.0
        %vm1254 = vcmp.gt.f32.partialorder %v750, 0.0
        %vm1255 = vcmp.gt.f32.partialorder %v752, 0.0
        %vm1256 = vcmp.gt.f32.partialorder %v755, 0.0
        %vm1257 = vcmp.gt.f32.partialorder %v757, 0.0
        %vm1258 = vcmp.gt.f32.partialorder %v760, 0.0
        %vm1259 = vcmp.gt.f32.partialorder %v762, 0.0
        %vm1260 = vcmp.gt.f32.partialorder %v765, 0.0
        %vm1261 = vcmp.gt.f32.partialorder %v767, 0.0
        %vm1262 = vcmp.gt.f32.partialorder %v770, 0.0
        %vm1263 = vcmp.gt.f32.partialorder %v772, 0.0
        %vm1264 = vcmp.gt.f32.partialorder %v775, 0.0
        %vm1265 = vcmp.gt.f32.partialorder %v777, 0.0
        %vm1266 = vcmp.gt.f32.partialorder %v780, 0.0
        %vm1267 = vcmp.gt.f32.partialorder %v782, 0.0
        %vm1268 = vcmp.gt.f32.partialorder %v785, 0.0
        %vm1269 = vcmp.gt.f32.partialorder %v787, 0.0
        %vm1270 = vcmp.gt.f32.partialorder %v790, 0.0
        %vm1271 = vcmp.gt.f32.partialorder %v792, 0.0
        %vm1272 = vcmp.gt.f32.partialorder %v795, 0.0
        %vm1273 = vcmp.gt.f32.partialorder %v797, 0.0
        %vm1274 = vcmp.gt.f32.partialorder %v800, 0.0
        %vm1275 = vcmp.gt.f32.partialorder %v802, 0.0
        %vm1276 = vcmp.gt.f32.partialorder %v805, 0.0
        %vm1277 = vcmp.gt.f32.partialorder %v807, 0.0
        %vm1278 = vcmp.gt.f32.partialorder %v810, 0.0
        %vm1279 = vcmp.gt.f32.partialorder %v812, 0.0
        %vm1280 = vcmp.gt.f32.partialorder %v815, 0.0
        %vm1281 = vcmp.gt.f32.partialorder %v817, 0.0
        %vm1282 = vcmp.gt.f32.partialorder %v820, 0.0
        %vm1283 = vcmp.gt.f32.partialorder %v822, 0.0
        %vm1284 = vcmp.gt.f32.partialorder %v825, 0.0
        %vm1285 = vcmp.gt.f32.partialorder %v827, 0.0
        %vm1286 = vcmp.gt.f32.partialorder %v830, 0.0
        %vm1287 = vcmp.gt.f32.partialorder %v832, 0.0
        %vm1288 = vcmp.gt.f32.partialorder %v835, 0.0
        %vm1289 = vcmp.gt.f32.partialorder %v837, 0.0
        %vm1290 = vcmp.gt.f32.partialorder %v840, 0.0
        %vm1291 = vcmp.gt.f32.partialorder %v842, 0.0
        %v1292 = vsel %vm1228, %v685, %v1164
        %v1293 = vsel %vm1229, %v687, %v1165
        %v1294 = vsel %vm1230, %v690, %v1166
        %v1295 = vsel %vm1231, %v692, %v1167
        %v1296 = vsel %vm1232, %v695, %v1168
        %v1297 = vsel %vm1233, %v697, %v1169
        %v1298 = vsel %vm1234, %v700, %v1170
        %v1299 = vsel %vm1235, %v702, %v1171
        %v1300 = vsel %vm1236, %v705, %v1172
        %v1301 = vsel %vm1237, %v707, %v1173
        %v1302 = vsel %vm1238, %v710, %v1174
        %v1303 = vsel %vm1239, %v712, %v1175
        %v1304 = vsel %vm1240, %v715, %v1176
        %v1305 = vsel %vm1241, %v717, %v1177
        %v1306 = vsel %vm1242, %v720, %v1178
        %v1307 = vsel %vm1243, %v722, %v1179
        %v1308 = vsel %vm1244, %v725, %v1180
        %v1309 = vsel %vm1245, %v727, %v1181
        %v1310 = vsel %vm1246, %v730, %v1182
        %v1311 = vsel %vm1247, %v732, %v1183
        %v1312 = vsel %vm1248, %v735, %v1184
        %v1313 = vsel %vm1249, %v737, %v1185
        %v1314 = vsel %vm1250, %v740, %v1186
        %v1315 = vsel %vm1251, %v742, %v1187
        %v1316 = vsel %vm1252, %v745, %v1188
        %v1317 = vsel %vm1253, %v747, %v1189
        %v1318 = vsel %vm1254, %v750, %v1190
        %v1319 = vsel %vm1255, %v752, %v1191
        %v1320 = vsel %vm1256, %v755, %v1192
        %v1321 = vsel %vm1257, %v757, %v1193
        %v1322 = vsel %vm1258, %v760, %v1194
        %v1323 = vsel %vm1259, %v762, %v1195
        %v1324 = vsel %vm1260, %v765, %v1196
        %v1325 = vsel %vm1261, %v767, %v1197
        %v1326 = vsel %vm1262, %v770, %v1198
        %v1327 = vsel %vm1263, %v772, %v1199
        %v1328 = vsel %vm1264, %v775, %v1200
        %v1329 = vsel %vm1265, %v777, %v1201
        %v1330 = vsel %vm1266, %v780, %v1202
        %v1331 = vsel %vm1267, %v782, %v1203
        %v1332 = vsel %vm1268, %v785, %v1204
        %v1333 = vsel %vm1269, %v787, %v1205
        %v1334 = vsel %vm1270, %v790, %v1206
        %v1335 = vsel %vm1271, %v792, %v1207
        %v1336 = vsel %vm1272, %v795, %v1208
        %v1337 = vsel %vm1273, %v797, %v1209
        %v1338 = vsel %vm1274, %v800, %v1210
        %v1339 = vsel %vm1275, %v802, %v1211
        %v1340 = vsel %vm1276, %v805, %v1212
        %v1341 = vsel %vm1277, %v807, %v1213
        %v1342 = vsel %vm1278, %v810, %v1214
        %v1343 = vsel %vm1279, %v812, %v1215
        %v1344 = vsel %vm1280, %v815, %v1216
        %v1345 = vsel %vm1281, %v817, %v1217
        %v1346 = vsel %vm1282, %v820, %v1218
        %v1347 = vsel %vm1283, %v822, %v1219
        %v1348 = vsel %vm1284, %v825, %v1220
        %v1349 = vsel %vm1285, %v827, %v1221
        %v1350 = vsel %vm1286, %v830, %v1222
        %v1351 = vsel %vm1287, %v832, %v1223
        %v1352 = vsel %vm1288, %v835, %v1224
        %v1353 = vsel %vm1289, %v837, %v1225
        %v1354 = vsel %vm1290, %v840, %v1226
        %v1355 = vsel %vm1291, %v842, %v1227
        %v1356 = vpack.c.bf16 %v1293, %v1292
        %v1357 = vpack.c.bf16 %v1295, %v1294
        %v1358 = vpack.c.bf16 %v1297, %v1296
        %v1359 = vpack.c.bf16 %v1299, %v1298
        %v1360 = vpack.c.bf16 %v1301, %v1300
        %v1361 = vpack.c.bf16 %v1303, %v1302
        %v1362 = vpack.c.bf16 %v1305, %v1304
        %v1363 = vpack.c.bf16 %v1307, %v1306
        %v1364 = vpack.c.bf16 %v1309, %v1308
        %v1365 = vpack.c.bf16 %v1311, %v1310
        %v1366 = vpack.c.bf16 %v1313, %v1312
        %v1367 = vpack.c.bf16 %v1315, %v1314
        %v1368 = vpack.c.bf16 %v1317, %v1316
        %v1369 = vpack.c.bf16 %v1319, %v1318
        %v1370 = vpack.c.bf16 %v1321, %v1320
        %v1371 = vpack.c.bf16 %v1323, %v1322
        %v1372 = vpack.c.bf16 %v1325, %v1324
        %v1373 = vpack.c.bf16 %v1327, %v1326
        %v1374 = vpack.c.bf16 %v1329, %v1328
        %v1375 = vpack.c.bf16 %v1331, %v1330
        %v1376 = vpack.c.bf16 %v1333, %v1332
        %v1377 = vpack.c.bf16 %v1335, %v1334
        %v1378 = vpack.c.bf16 %v1337, %v1336
        %v1379 = vpack.c.bf16 %v1339, %v1338
        %v1380 = vpack.c.bf16 %v1341, %v1340
        %v1381 = vpack.c.bf16 %v1343, %v1342
        %v1382 = vpack.c.bf16 %v1345, %v1344
        %v1383 = vpack.c.bf16 %v1347, %v1346
        %v1384 = vpack.c.bf16 %v1349, %v1348
        %v1385 = vpack.c.bf16 %v1351, %v1350
        %v1386 = vpack.c.bf16 %v1353, %v1352
        %v1387 = vpack.c.bf16 %v1355, %v1354
        %v1388 = vld [vmem:[#allocation7] sm:$0xf]
        %v1389 = vld [vmem:[#allocation7 + $0x4] sm:$0xf]
        %v1390 = vld [vmem:[#allocation7 + $0x8] sm:$0xf]
        %v1391 = vld [vmem:[#allocation7 + $0xc] sm:$0xf]
        %v1392 = vld [vmem:[#allocation7 + $0x10] sm:$0xf]
        %v1393 = vld [vmem:[#allocation7 + $0x14] sm:$0xf]
        %v1394 = vld [vmem:[#allocation7 + $0x18] sm:$0xf]
        %v1395 = vld [vmem:[#allocation7 + $0x1c] sm:$0xf]
        %v1396 = vld [vmem:[#allocation7 + $0x20] sm:$0xf]
        %v1397 = vld [vmem:[#allocation7 + $0x24] sm:$0xf]
        %v1398 = vld [vmem:[#allocation7 + $0x28] sm:$0xf]
        %v1399 = vld [vmem:[#allocation7 + $0x2c] sm:$0xf]
        %v1400 = vld [vmem:[#allocation7 + $0x30] sm:$0xf]
        %v1401 = vld [vmem:[#allocation7 + $0x34] sm:$0xf]
        %v1402 = vld [vmem:[#allocation7 + $0x38] sm:$0xf]
        %v1403 = vld [vmem:[#allocation7 + $0x3c] sm:$0xf]
        %v1404 = vld [vmem:[%s4] sm:$0x1]
        %v1406 = vperm.slane %v1404, 0
        %v1424 = vunpack.c.l.b16 %v1388
        %v1425 = vunpack.c.l.b16 %v1389
        %v1426 = vunpack.c.l.b16 %v1390
        %v1427 = vunpack.c.l.b16 %v1391
        %v1428 = vunpack.c.l.b16 %v1392
        %v1429 = vunpack.c.l.b16 %v1393
        %v1430 = vunpack.c.l.b16 %v1394
        %v1431 = vunpack.c.l.b16 %v1395
        %v1432 = vunpack.c.l.b16 %v1396
        %v1433 = vunpack.c.l.b16 %v1397
        %v1434 = vunpack.c.l.b16 %v1398
        %v1435 = vunpack.c.l.b16 %v1399
        %v1436 = vunpack.c.l.b16 %v1400
        %v1437 = vunpack.c.l.b16 %v1401
        %v1438 = vunpack.c.l.b16 %v1402
        %v1439 = vunpack.c.l.b16 %v1403
        %v1440 = vpack.c.b16 %v1425, %v1424
        %v1441 = vpack.c.b16 %v1427, %v1426
        %v1442 = vpack.c.b16 %v1429, %v1428
        %v1443 = vpack.c.b16 %v1431, %v1430
        %v1444 = vpack.c.b16 %v1433, %v1432
        %v1445 = vpack.c.b16 %v1435, %v1434
        %v1446 = vpack.c.b16 %v1437, %v1436
        %v1447 = vpack.c.b16 %v1439, %v1438
        %1456 = vmatpush.bf16.msra.mxu0 %v1447
        %1457 = vmatpush.bf16.msra.mxu0 %v1446
        %1458 = vmatpush.bf16.msra.mxu0 %v1445
        %1459 = vmatpush.bf16.msra.mxu0 %v1444
        %1460 = vmatpush.bf16.msra.mxu0 %v1443
        %1461 = vmatpush.bf16.msra.mxu0 %v1442
        %1462 = vmatpush.bf16.msra.mxu0 %v1441
        %1463 = vmatpush.bf16.msra.mxu0 %v1440
        %1464 = vmatmul.bf16.gmra.mxu0 %v1356
        %v1465 = vpop.f32.mrf.mxu0
        %v1466 = vadd.f32 %v1406, %v1465
        %v1467 = vpop.f32.mrf.mxu0
        %v1468 = vadd.f32 %v1406, %v1467
        %1469 = vmatmul.bf16.gmra.mxu0 %v1357
        %v1470 = vpop.f32.mrf.mxu0
        %v1471 = vadd.f32 %v1406, %v1470
        %v1472 = vpop.f32.mrf.mxu0
        %v1473 = vadd.f32 %v1406, %v1472
        %1474 = vmatmul.bf16.gmra.mxu0 %v1358
        %v1475 = vpop.f32.mrf.mxu0
        %v1476 = vadd.f32 %v1406, %v1475
        %v1477 = vpop.f32.mrf.mxu0
        %v1478 = vadd.f32 %v1406, %v1477
        %1479 = vmatmul.bf16.gmra.mxu0 %v1359
        %v1480 = vpop.f32.mrf.mxu0
        %v1481 = vadd.f32 %v1406, %v1480
        %v1482 = vpop.f32.mrf.mxu0
        %v1483 = vadd.f32 %v1406, %v1482
        %1484 = vmatmul.bf16.gmra.mxu0 %v1360
        %v1485 = vpop.f32.mrf.mxu0
        %v1486 = vadd.f32 %v1406, %v1485
        %v1487 = vpop.f32.mrf.mxu0
        %v1488 = vadd.f32 %v1406, %v1487
        %1489 = vmatmul.bf16.gmra.mxu0 %v1361
        %v1490 = vpop.f32.mrf.mxu0
        %v1491 = vadd.f32 %v1406, %v1490
        %v1492 = vpop.f32.mrf.mxu0
        %v1493 = vadd.f32 %v1406, %v1492
        %1494 = vmatmul.bf16.gmra.mxu0 %v1362
        %v1495 = vpop.f32.mrf.mxu0
        %v1496 = vadd.f32 %v1406, %v1495
        %v1497 = vpop.f32.mrf.mxu0
        %v1498 = vadd.f32 %v1406, %v1497
        %1499 = vmatmul.bf16.gmra.mxu0 %v1363
        %v1500 = vpop.f32.mrf.mxu0
        %v1501 = vadd.f32 %v1406, %v1500
        %v1502 = vpop.f32.mrf.mxu0
        %v1503 = vadd.f32 %v1406, %v1502
        %1504 = vmatmul.bf16.gmra.mxu0 %v1364
        %v1505 = vpop.f32.mrf.mxu0
        %v1506 = vadd.f32 %v1406, %v1505
        %v1507 = vpop.f32.mrf.mxu0
        %v1508 = vadd.f32 %v1406, %v1507
        %1509 = vmatmul.bf16.gmra.mxu0 %v1365
        %v1510 = vpop.f32.mrf.mxu0
        %v1511 = vadd.f32 %v1406, %v1510
        %v1512 = vpop.f32.mrf.mxu0
        %v1513 = vadd.f32 %v1406, %v1512
        %1514 = vmatmul.bf16.gmra.mxu0 %v1366
        %v1515 = vpop.f32.mrf.mxu0
        %v1516 = vadd.f32 %v1406, %v1515
        %v1517 = vpop.f32.mrf.mxu0
        %v1518 = vadd.f32 %v1406, %v1517
        %1519 = vmatmul.bf16.gmra.mxu0 %v1367
        %v1520 = vpop.f32.mrf.mxu0
        %v1521 = vadd.f32 %v1406, %v1520
        %v1522 = vpop.f32.mrf.mxu0
        %v1523 = vadd.f32 %v1406, %v1522
        %1524 = vmatmul.bf16.gmra.mxu0 %v1368
        %v1525 = vpop.f32.mrf.mxu0
        %v1526 = vadd.f32 %v1406, %v1525
        %v1527 = vpop.f32.mrf.mxu0
        %v1528 = vadd.f32 %v1406, %v1527
        %1529 = vmatmul.bf16.gmra.mxu0 %v1369
        %v1530 = vpop.f32.mrf.mxu0
        %v1531 = vadd.f32 %v1406, %v1530
        %v1532 = vpop.f32.mrf.mxu0
        %v1533 = vadd.f32 %v1406, %v1532
        %1534 = vmatmul.bf16.gmra.mxu0 %v1370
        %v1535 = vpop.f32.mrf.mxu0
        %v1536 = vadd.f32 %v1406, %v1535
        %v1537 = vpop.f32.mrf.mxu0
        %v1538 = vadd.f32 %v1406, %v1537
        %1539 = vmatmul.bf16.gmra.mxu0 %v1371
        %v1540 = vpop.f32.mrf.mxu0
        %v1541 = vadd.f32 %v1406, %v1540
        %v1542 = vpop.f32.mrf.mxu0
        %v1543 = vadd.f32 %v1406, %v1542
        %1544 = vmatmul.bf16.gmra.mxu0 %v1372
        %v1545 = vpop.f32.mrf.mxu0
        %v1546 = vadd.f32 %v1406, %v1545
        %v1547 = vpop.f32.mrf.mxu0
        %v1548 = vadd.f32 %v1406, %v1547
        %1549 = vmatmul.bf16.gmra.mxu0 %v1373
        %v1550 = vpop.f32.mrf.mxu0
        %v1551 = vadd.f32 %v1406, %v1550
        %v1552 = vpop.f32.mrf.mxu0
        %v1553 = vadd.f32 %v1406, %v1552
        %1554 = vmatmul.bf16.gmra.mxu0 %v1374
        %v1555 = vpop.f32.mrf.mxu0
        %v1556 = vadd.f32 %v1406, %v1555
        %v1557 = vpop.f32.mrf.mxu0
        %v1558 = vadd.f32 %v1406, %v1557
        %1559 = vmatmul.bf16.gmra.mxu0 %v1375
        %v1560 = vpop.f32.mrf.mxu0
        %v1561 = vadd.f32 %v1406, %v1560
        %v1562 = vpop.f32.mrf.mxu0
        %v1563 = vadd.f32 %v1406, %v1562
        %1564 = vmatmul.bf16.gmra.mxu0 %v1376
        %v1565 = vpop.f32.mrf.mxu0
        %v1566 = vadd.f32 %v1406, %v1565
        %v1567 = vpop.f32.mrf.mxu0
        %v1568 = vadd.f32 %v1406, %v1567
        %1569 = vmatmul.bf16.gmra.mxu0 %v1377
        %v1570 = vpop.f32.mrf.mxu0
        %v1571 = vadd.f32 %v1406, %v1570
        %v1572 = vpop.f32.mrf.mxu0
        %v1573 = vadd.f32 %v1406, %v1572
        %1574 = vmatmul.bf16.gmra.mxu0 %v1378
        %v1575 = vpop.f32.mrf.mxu0
        %v1576 = vadd.f32 %v1406, %v1575
        %v1577 = vpop.f32.mrf.mxu0
        %v1578 = vadd.f32 %v1406, %v1577
        %1579 = vmatmul.bf16.gmra.mxu0 %v1379
        %v1580 = vpop.f32.mrf.mxu0
        %v1581 = vadd.f32 %v1406, %v1580
        %v1582 = vpop.f32.mrf.mxu0
        %v1583 = vadd.f32 %v1406, %v1582
        %1584 = vmatmul.bf16.gmra.mxu0 %v1380
        %v1585 = vpop.f32.mrf.mxu0
        %v1586 = vadd.f32 %v1406, %v1585
        %v1587 = vpop.f32.mrf.mxu0
        %v1588 = vadd.f32 %v1406, %v1587
        %1589 = vmatmul.bf16.gmra.mxu0 %v1381
        %v1590 = vpop.f32.mrf.mxu0
        %v1591 = vadd.f32 %v1406, %v1590
        %v1592 = vpop.f32.mrf.mxu0
        %v1593 = vadd.f32 %v1406, %v1592
        %1594 = vmatmul.bf16.gmra.mxu0 %v1382
        %v1595 = vpop.f32.mrf.mxu0
        %v1596 = vadd.f32 %v1406, %v1595
        %v1597 = vpop.f32.mrf.mxu0
        %v1598 = vadd.f32 %v1406, %v1597
        %1599 = vmatmul.bf16.gmra.mxu0 %v1383
        %v1600 = vpop.f32.mrf.mxu0
        %v1601 = vadd.f32 %v1406, %v1600
        %v1602 = vpop.f32.mrf.mxu0
        %v1603 = vadd.f32 %v1406, %v1602
        %1604 = vmatmul.bf16.gmra.mxu0 %v1384
        %v1605 = vpop.f32.mrf.mxu0
        %v1606 = vadd.f32 %v1406, %v1605
        %v1607 = vpop.f32.mrf.mxu0
        %v1608 = vadd.f32 %v1406, %v1607
        %1609 = vmatmul.bf16.gmra.mxu0 %v1385
        %v1610 = vpop.f32.mrf.mxu0
        %v1611 = vadd.f32 %v1406, %v1610
        %v1612 = vpop.f32.mrf.mxu0
        %v1613 = vadd.f32 %v1406, %v1612
        %1614 = vmatmul.bf16.gmra.mxu0 %v1386
        %v1615 = vpop.f32.mrf.mxu0
        %v1616 = vadd.f32 %v1406, %v1615
        %v1617 = vpop.f32.mrf.mxu0
        %v1618 = vadd.f32 %v1406, %v1617
        %1619 = vmatmul.bf16.gmra.mxu0 %v1387
        %v1620 = vpop.f32.mrf.mxu0
        %v1621 = vadd.f32 %v1406, %v1620
        %v1622 = vpop.f32.mrf.mxu0
        %v1623 = vadd.f32 %v1406, %v1622
        %1624 = vdwg.mxu0
        %v1625 = vmin.f32 %v1466, 0.0
        %v1626 = vmin.f32 %v1468, 0.0
        %v1627 = vmin.f32 %v1471, 0.0
        %v1628 = vmin.f32 %v1473, 0.0
        %v1629 = vmin.f32 %v1476, 0.0
        %v1630 = vmin.f32 %v1478, 0.0
        %v1631 = vmin.f32 %v1481, 0.0
        %v1632 = vmin.f32 %v1483, 0.0
        %v1633 = vmin.f32 %v1486, 0.0
        %v1634 = vmin.f32 %v1488, 0.0
        %v1635 = vmin.f32 %v1491, 0.0
        %v1636 = vmin.f32 %v1493, 0.0
        %v1637 = vmin.f32 %v1496, 0.0
        %v1638 = vmin.f32 %v1498, 0.0
        %v1639 = vmin.f32 %v1501, 0.0
        %v1640 = vmin.f32 %v1503, 0.0
        %v1641 = vmin.f32 %v1506, 0.0
        %v1642 = vmin.f32 %v1508, 0.0
        %v1643 = vmin.f32 %v1511, 0.0
        %v1644 = vmin.f32 %v1513, 0.0
        %v1645 = vmin.f32 %v1516, 0.0
        %v1646 = vmin.f32 %v1518, 0.0
        %v1647 = vmin.f32 %v1521, 0.0
        %v1648 = vmin.f32 %v1523, 0.0
        %v1649 = vmin.f32 %v1526, 0.0
        %v1650 = vmin.f32 %v1528, 0.0
        %v1651 = vmin.f32 %v1531, 0.0
        %v1652 = vmin.f32 %v1533, 0.0
        %v1653 = vmin.f32 %v1536, 0.0
        %v1654 = vmin.f32 %v1538, 0.0
        %v1655 = vmin.f32 %v1541, 0.0
        %v1656 = vmin.f32 %v1543, 0.0
        %v1657 = vmin.f32 %v1546, 0.0
        %v1658 = vmin.f32 %v1548, 0.0
        %v1659 = vmin.f32 %v1551, 0.0
        %v1660 = vmin.f32 %v1553, 0.0
        %v1661 = vmin.f32 %v1556, 0.0
        %v1662 = vmin.f32 %v1558, 0.0
        %v1663 = vmin.f32 %v1561, 0.0
        %v1664 = vmin.f32 %v1563, 0.0
        %v1665 = vmin.f32 %v1566, 0.0
        %v1666 = vmin.f32 %v1568, 0.0
        %v1667 = vmin.f32 %v1571, 0.0
        %v1668 = vmin.f32 %v1573, 0.0
        %v1669 = vmin.f32 %v1576, 0.0
        %v1670 = vmin.f32 %v1578, 0.0
        %v1671 = vmin.f32 %v1581, 0.0
        %v1672 = vmin.f32 %v1583, 0.0
        %v1673 = vmin.f32 %v1586, 0.0
        %v1674 = vmin.f32 %v1588, 0.0
        %v1675 = vmin.f32 %v1591, 0.0
        %v1676 = vmin.f32 %v1593, 0.0
        %v1677 = vmin.f32 %v1596, 0.0
        %v1678 = vmin.f32 %v1598, 0.0
        %v1679 = vmin.f32 %v1601, 0.0
        %v1680 = vmin.f32 %v1603, 0.0
        %v1681 = vmin.f32 %v1606, 0.0
        %v1682 = vmin.f32 %v1608, 0.0
        %v1683 = vmin.f32 %v1611, 0.0
        %v1684 = vmin.f32 %v1613, 0.0
        %v1685 = vmin.f32 %v1616, 0.0
        %v1686 = vmin.f32 %v1618, 0.0
        %v1687 = vmin.f32 %v1621, 0.0
        %v1688 = vmin.f32 %v1623, 0.0
        %v1689 = vmul.f32 %v1625, 10.0
        %v1690 = vmul.f32 %v1626, 10.0
        %v1691 = vmul.f32 %v1627, 10.0
        %v1692 = vmul.f32 %v1628, 10.0
        %v1693 = vmul.f32 %v1629, 10.0
        %v1694 = vmul.f32 %v1630, 10.0
        %v1695 = vmul.f32 %v1631, 10.0
        %v1696 = vmul.f32 %v1632, 10.0
        %v1697 = vmul.f32 %v1633, 10.0
        %v1698 = vmul.f32 %v1634, 10.0
        %v1699 = vmul.f32 %v1635, 10.0
        %v1700 = vmul.f32 %v1636, 10.0
        %v1701 = vmul.f32 %v1637, 10.0
        %v1702 = vmul.f32 %v1638, 10.0
        %v1703 = vmul.f32 %v1639, 10.0
        %v1704 = vmul.f32 %v1640, 10.0
        %v1705 = vmul.f32 %v1641, 10.0
        %v1706 = vmul.f32 %v1642, 10.0
        %v1707 = vmul.f32 %v1643, 10.0
        %v1708 = vmul.f32 %v1644, 10.0
        %v1709 = vmul.f32 %v1645, 10.0
        %v1710 = vmul.f32 %v1646, 10.0
        %v1711 = vmul.f32 %v1647, 10.0
        %v1712 = vmul.f32 %v1648, 10.0
        %v1713 = vmul.f32 %v1649, 10.0
        %v1714 = vmul.f32 %v1650, 10.0
        %v1715 = vmul.f32 %v1651, 10.0
        %v1716 = vmul.f32 %v1652, 10.0
        %v1717 = vmul.f32 %v1653, 10.0
        %v1718 = vmul.f32 %v1654, 10.0
        %v1719 = vmul.f32 %v1655, 10.0
        %v1720 = vmul.f32 %v1656, 10.0
        %v1721 = vmul.f32 %v1657, 10.0
        %v1722 = vmul.f32 %v1658, 10.0
        %v1723 = vmul.f32 %v1659, 10.0
        %v1724 = vmul.f32 %v1660, 10.0
        %v1725 = vmul.f32 %v1661, 10.0
        %v1726 = vmul.f32 %v1662, 10.0
        %v1727 = vmul.f32 %v1663, 10.0
        %v1728 = vmul.f32 %v1664, 10.0
        %v1729 = vmul.f32 %v1665, 10.0
        %v1730 = vmul.f32 %v1666, 10.0
        %v1731 = vmul.f32 %v1667, 10.0
        %v1732 = vmul.f32 %v1668, 10.0
        %v1733 = vmul.f32 %v1669, 10.0
        %v1734 = vmul.f32 %v1670, 10.0
        %v1735 = vmul.f32 %v1671, 10.0
        %v1736 = vmul.f32 %v1672, 10.0
        %v1737 = vmul.f32 %v1673, 10.0
        %v1738 = vmul.f32 %v1674, 10.0
        %v1739 = vmul.f32 %v1675, 10.0
        %v1740 = vmul.f32 %v1676, 10.0
        %v1741 = vmul.f32 %v1677, 10.0
        %v1742 = vmul.f32 %v1678, 10.0
        %v1743 = vmul.f32 %v1679, 10.0
        %v1744 = vmul.f32 %v1680, 10.0
        %v1745 = vmul.f32 %v1681, 10.0
        %v1746 = vmul.f32 %v1682, 10.0
        %v1747 = vmul.f32 %v1683, 10.0
        %v1748 = vmul.f32 %v1684, 10.0
        %v1749 = vmul.f32 %v1685, 10.0
        %v1750 = vmul.f32 %v1686, 10.0
        %v1751 = vmul.f32 %v1687, 10.0
        %v1752 = vmul.f32 %v1688, 10.0
        %v1753 = vmul.f32 %v1689, 1.442695
        %v1754 = vpow.pop %v1753
        %v1755 = vmul.f32 %v1690, 1.442695
        %v1756 = vpow.pop %v1755
        %v1757 = vmul.f32 %v1691, 1.442695
        %v1758 = vpow.pop %v1757
        %v1759 = vmul.f32 %v1692, 1.442695
        %v1760 = vpow.pop %v1759
        %v1761 = vmul.f32 %v1693, 1.442695
        %v1762 = vpow.pop %v1761
        %v1763 = vmul.f32 %v1694, 1.442695
        %v1764 = vpow.pop %v1763
        %v1765 = vmul.f32 %v1695, 1.442695
        %v1766 = vpow.pop %v1765
        %v1767 = vmul.f32 %v1696, 1.442695
        %v1768 = vpow.pop %v1767
        %v1769 = vmul.f32 %v1697, 1.442695
        %v1770 = vpow.pop %v1769
        %v1771 = vmul.f32 %v1698, 1.442695
        %v1772 = vpow.pop %v1771
        %v1773 = vmul.f32 %v1699, 1.442695
        %v1774 = vpow.pop %v1773
        %v1775 = vmul.f32 %v1700, 1.442695
        %v1776 = vpow.pop %v1775
        %v1777 = vmul.f32 %v1701, 1.442695
        %v1778 = vpow.pop %v1777
        %v1779 = vmul.f32 %v1702, 1.442695
        %v1780 = vpow.pop %v1779
        %v1781 = vmul.f32 %v1703, 1.442695
        %v1782 = vpow.pop %v1781
        %v1783 = vmul.f32 %v1704, 1.442695
        %v1784 = vpow.pop %v1783
        %v1785 = vmul.f32 %v1705, 1.442695
        %v1786 = vpow.pop %v1785
        %v1787 = vmul.f32 %v1706, 1.442695
        %v1788 = vpow.pop %v1787
        %v1789 = vmul.f32 %v1707, 1.442695
        %v1790 = vpow.pop %v1789
        %v1791 = vmul.f32 %v1708, 1.442695
        %v1792 = vpow.pop %v1791
        %v1793 = vmul.f32 %v1709, 1.442695
        %v1794 = vpow.pop %v1793
        %v1795 = vmul.f32 %v1710, 1.442695
        %v1796 = vpow.pop %v1795
        %v1797 = vmul.f32 %v1711, 1.442695
        %v1798 = vpow.pop %v1797
        %v1799 = vmul.f32 %v1712, 1.442695
        %v1800 = vpow.pop %v1799
        %v1801 = vmul.f32 %v1713, 1.442695
        %v1802 = vpow.pop %v1801
        %v1803 = vmul.f32 %v1714, 1.442695
        %v1804 = vpow.pop %v1803
        %v1805 = vmul.f32 %v1715, 1.442695
        %v1806 = vpow.pop %v1805
        %v1807 = vmul.f32 %v1716, 1.442695
        %v1808 = vpow.pop %v1807
        %v1809 = vmul.f32 %v1717, 1.442695
        %v1810 = vpow.pop %v1809
        %v1811 = vmul.f32 %v1718, 1.442695
        %v1812 = vpow.pop %v1811
        %v1813 = vmul.f32 %v1719, 1.442695
        %v1814 = vpow.pop %v1813
        %v1815 = vmul.f32 %v1720, 1.442695
        %v1816 = vpow.pop %v1815
        %v1817 = vmul.f32 %v1721, 1.442695
        %v1818 = vpow.pop %v1817
        %v1819 = vmul.f32 %v1722, 1.442695
        %v1820 = vpow.pop %v1819
        %v1821 = vmul.f32 %v1723, 1.442695
        %v1822 = vpow.pop %v1821
        %v1823 = vmul.f32 %v1724, 1.442695
        %v1824 = vpow.pop %v1823
        %v1825 = vmul.f32 %v1725, 1.442695
        %v1826 = vpow.pop %v1825
        %v1827 = vmul.f32 %v1726, 1.442695
        %v1828 = vpow.pop %v1827
        %v1829 = vmul.f32 %v1727, 1.442695
        %v1830 = vpow.pop %v1829
        %v1831 = vmul.f32 %v1728, 1.442695
        %v1832 = vpow.pop %v1831
        %v1833 = vmul.f32 %v1729, 1.442695
        %v1834 = vpow.pop %v1833
        %v1835 = vmul.f32 %v1730, 1.442695
        %v1836 = vpow.pop %v1835
        %v1837 = vmul.f32 %v1731, 1.442695
        %v1838 = vpow.pop %v1837
        %v1839 = vmul.f32 %v1732, 1.442695
        %v1840 = vpow.pop %v1839
        %v1841 = vmul.f32 %v1733, 1.442695
        %v1842 = vpow.pop %v1841
        %v1843 = vmul.f32 %v1734, 1.442695
        %v1844 = vpow.pop %v1843
        %v1845 = vmul.f32 %v1735, 1.442695
        %v1846 = vpow.pop %v1845
        %v1847 = vmul.f32 %v1736, 1.442695
        %v1848 = vpow.pop %v1847
        %v1849 = vmul.f32 %v1737, 1.442695
        %v1850 = vpow.pop %v1849
        %v1851 = vmul.f32 %v1738, 1.442695
        %v1852 = vpow.pop %v1851
        %v1853 = vmul.f32 %v1739, 1.442695
        %v1854 = vpow.pop %v1853
        %v1855 = vmul.f32 %v1740, 1.442695
        %v1856 = vpow.pop %v1855
        %v1857 = vmul.f32 %v1741, 1.442695
        %v1858 = vpow.pop %v1857
        %v1859 = vmul.f32 %v1742, 1.442695
        %v1860 = vpow.pop %v1859
        %v1861 = vmul.f32 %v1743, 1.442695
        %v1862 = vpow.pop %v1861
        %v1863 = vmul.f32 %v1744, 1.442695
        %v1864 = vpow.pop %v1863
        %v1865 = vmul.f32 %v1745, 1.442695
        %v1866 = vpow.pop %v1865
        %v1867 = vmul.f32 %v1746, 1.442695
        %v1868 = vpow.pop %v1867
        %v1869 = vmul.f32 %v1747, 1.442695
        %v1870 = vpow.pop %v1869
        %v1871 = vmul.f32 %v1748, 1.442695
        %v1872 = vpow.pop %v1871
        %v1873 = vmul.f32 %v1749, 1.442695
        %v1874 = vpow.pop %v1873
        %v1875 = vmul.f32 %v1750, 1.442695
        %v1876 = vpow.pop %v1875
        %v1877 = vmul.f32 %v1751, 1.442695
        %v1878 = vpow.pop %v1877
        %v1879 = vmul.f32 %v1752, 1.442695
        %v1880 = vpow.pop %v1879
        %v1881 = vsub.f32 %v1754, 1.0
        %v1882 = vsub.f32 %v1756, 1.0
        %v1883 = vsub.f32 %v1758, 1.0
        %v1884 = vsub.f32 %v1760, 1.0
        %v1885 = vsub.f32 %v1762, 1.0
        %v1886 = vsub.f32 %v1764, 1.0
        %v1887 = vsub.f32 %v1766, 1.0
        %v1888 = vsub.f32 %v1768, 1.0
        %v1889 = vsub.f32 %v1770, 1.0
        %v1890 = vsub.f32 %v1772, 1.0
        %v1891 = vsub.f32 %v1774, 1.0
        %v1892 = vsub.f32 %v1776, 1.0
        %v1893 = vsub.f32 %v1778, 1.0
        %v1894 = vsub.f32 %v1780, 1.0
        %v1895 = vsub.f32 %v1782, 1.0
        %v1896 = vsub.f32 %v1784, 1.0
        %v1897 = vsub.f32 %v1786, 1.0
        %v1898 = vsub.f32 %v1788, 1.0
        %v1899 = vsub.f32 %v1790, 1.0
        %v1900 = vsub.f32 %v1792, 1.0
        %v1901 = vsub.f32 %v1794, 1.0
        %v1902 = vsub.f32 %v1796, 1.0
        %v1903 = vsub.f32 %v1798, 1.0
        %v1904 = vsub.f32 %v1800, 1.0
        %v1905 = vsub.f32 %v1802, 1.0
        %v1906 = vsub.f32 %v1804, 1.0
        %v1907 = vsub.f32 %v1806, 1.0
        %v1908 = vsub.f32 %v1808, 1.0
        %v1909 = vsub.f32 %v1810, 1.0
        %v1910 = vsub.f32 %v1812, 1.0
        %v1911 = vsub.f32 %v1814, 1.0
        %v1912 = vsub.f32 %v1816, 1.0
        %v1913 = vsub.f32 %v1818, 1.0
        %v1914 = vsub.f32 %v1820, 1.0
        %v1915 = vsub.f32 %v1822, 1.0
        %v1916 = vsub.f32 %v1824, 1.0
        %v1917 = vsub.f32 %v1826, 1.0
        %v1918 = vsub.f32 %v1828, 1.0
        %v1919 = vsub.f32 %v1830, 1.0
        %v1920 = vsub.f32 %v1832, 1.0
        %v1921 = vsub.f32 %v1834, 1.0
        %v1922 = vsub.f32 %v1836, 1.0
        %v1923 = vsub.f32 %v1838, 1.0
        %v1924 = vsub.f32 %v1840, 1.0
        %v1925 = vsub.f32 %v1842, 1.0
        %v1926 = vsub.f32 %v1844, 1.0
        %v1927 = vsub.f32 %v1846, 1.0
        %v1928 = vsub.f32 %v1848, 1.0
        %v1929 = vsub.f32 %v1850, 1.0
        %v1930 = vsub.f32 %v1852, 1.0
        %v1931 = vsub.f32 %v1854, 1.0
        %v1932 = vsub.f32 %v1856, 1.0
        %v1933 = vsub.f32 %v1858, 1.0
        %v1934 = vsub.f32 %v1860, 1.0
        %v1935 = vsub.f32 %v1862, 1.0
        %v1936 = vsub.f32 %v1864, 1.0
        %v1937 = vsub.f32 %v1866, 1.0
        %v1938 = vsub.f32 %v1868, 1.0
        %v1939 = vsub.f32 %v1870, 1.0
        %v1940 = vsub.f32 %v1872, 1.0
        %v1941 = vsub.f32 %v1874, 1.0
        %v1942 = vsub.f32 %v1876, 1.0
        %v1943 = vsub.f32 %v1878, 1.0
        %v1944 = vsub.f32 %v1880, 1.0
        %v1945 = vmul.f32 %v1881, 0.1
        %v1946 = vmul.f32 %v1882, 0.1
        %v1947 = vmul.f32 %v1883, 0.1
        %v1948 = vmul.f32 %v1884, 0.1
        %v1949 = vmul.f32 %v1885, 0.1
        %v1950 = vmul.f32 %v1886, 0.1
        %v1951 = vmul.f32 %v1887, 0.1
        %v1952 = vmul.f32 %v1888, 0.1
        %v1953 = vmul.f32 %v1889, 0.1
        %v1954 = vmul.f32 %v1890, 0.1
        %v1955 = vmul.f32 %v1891, 0.1
        %v1956 = vmul.f32 %v1892, 0.1
        %v1957 = vmul.f32 %v1893, 0.1
        %v1958 = vmul.f32 %v1894, 0.1
        %v1959 = vmul.f32 %v1895, 0.1
        %v1960 = vmul.f32 %v1896, 0.1
        %v1961 = vmul.f32 %v1897, 0.1
        %v1962 = vmul.f32 %v1898, 0.1
        %v1963 = vmul.f32 %v1899, 0.1
        %v1964 = vmul.f32 %v1900, 0.1
        %v1965 = vmul.f32 %v1901, 0.1
        %v1966 = vmul.f32 %v1902, 0.1
        %v1967 = vmul.f32 %v1903, 0.1
        %v1968 = vmul.f32 %v1904, 0.1
        %v1969 = vmul.f32 %v1905, 0.1
        %v1970 = vmul.f32 %v1906, 0.1
        %v1971 = vmul.f32 %v1907, 0.1
        %v1972 = vmul.f32 %v1908, 0.1
        %v1973 = vmul.f32 %v1909, 0.1
        %v1974 = vmul.f32 %v1910, 0.1
        %v1975 = vmul.f32 %v1911, 0.1
        %v1976 = vmul.f32 %v1912, 0.1
        %v1977 = vmul.f32 %v1913, 0.1
        %v1978 = vmul.f32 %v1914, 0.1
        %v1979 = vmul.f32 %v1915, 0.1
        %v1980 = vmul.f32 %v1916, 0.1
        %v1981 = vmul.f32 %v1917, 0.1
        %v1982 = vmul.f32 %v1918, 0.1
        %v1983 = vmul.f32 %v1919, 0.1
        %v1984 = vmul.f32 %v1920, 0.1
        %v1985 = vmul.f32 %v1921, 0.1
        %v1986 = vmul.f32 %v1922, 0.1
        %v1987 = vmul.f32 %v1923, 0.1
        %v1988 = vmul.f32 %v1924, 0.1
        %v1989 = vmul.f32 %v1925, 0.1
        %v1990 = vmul.f32 %v1926, 0.1
        %v1991 = vmul.f32 %v1927, 0.1
        %v1992 = vmul.f32 %v1928, 0.1
        %v1993 = vmul.f32 %v1929, 0.1
        %v1994 = vmul.f32 %v1930, 0.1
        %v1995 = vmul.f32 %v1931, 0.1
        %v1996 = vmul.f32 %v1932, 0.1
        %v1997 = vmul.f32 %v1933, 0.1
        %v1998 = vmul.f32 %v1934, 0.1
        %v1999 = vmul.f32 %v1935, 0.1
        %v2000 = vmul.f32 %v1936, 0.1
        %v2001 = vmul.f32 %v1937, 0.1
        %v2002 = vmul.f32 %v1938, 0.1
        %v2003 = vmul.f32 %v1939, 0.1
        %v2004 = vmul.f32 %v1940, 0.1
        %v2005 = vmul.f32 %v1941, 0.1
        %v2006 = vmul.f32 %v1942, 0.1
        %v2007 = vmul.f32 %v1943, 0.1
        %v2008 = vmul.f32 %v1944, 0.1
        %vm2009 = vcmp.gt.f32.partialorder %v1466, 0.0
        %vm2010 = vcmp.gt.f32.partialorder %v1468, 0.0
        %vm2011 = vcmp.gt.f32.partialorder %v1471, 0.0
        %vm2012 = vcmp.gt.f32.partialorder %v1473, 0.0
        %vm2013 = vcmp.gt.f32.partialorder %v1476, 0.0
        %vm2014 = vcmp.gt.f32.partialorder %v1478, 0.0
        %vm2015 = vcmp.gt.f32.partialorder %v1481, 0.0
        %vm2016 = vcmp.gt.f32.partialorder %v1483, 0.0
        %vm2017 = vcmp.gt.f32.partialorder %v1486, 0.0
        %vm2018 = vcmp.gt.f32.partialorder %v1488, 0.0
        %vm2019 = vcmp.gt.f32.partialorder %v1491, 0.0
        %vm2020 = vcmp.gt.f32.partialorder %v1493, 0.0
        %vm2021 = vcmp.gt.f32.partialorder %v1496, 0.0
        %vm2022 = vcmp.gt.f32.partialorder %v1498, 0.0
        %vm2023 = vcmp.gt.f32.partialorder %v1501, 0.0
        %vm2024 = vcmp.gt.f32.partialorder %v1503, 0.0
        %vm2025 = vcmp.gt.f32.partialorder %v1506, 0.0
        %vm2026 = vcmp.gt.f32.partialorder %v1508, 0.0
        %vm2027 = vcmp.gt.f32.partialorder %v1511, 0.0
        %vm2028 = vcmp.gt.f32.partialorder %v1513, 0.0
        %vm2029 = vcmp.gt.f32.partialorder %v1516, 0.0
        %vm2030 = vcmp.gt.f32.partialorder %v1518, 0.0
        %vm2031 = vcmp.gt.f32.partialorder %v1521, 0.0
        %vm2032 = vcmp.gt.f32.partialorder %v1523, 0.0
        %vm2033 = vcmp.gt.f32.partialorder %v1526, 0.0
        %vm2034 = vcmp.gt.f32.partialorder %v1528, 0.0
        %vm2035 = vcmp.gt.f32.partialorder %v1531, 0.0
        %vm2036 = vcmp.gt.f32.partialorder %v1533, 0.0
        %vm2037 = vcmp.gt.f32.partialorder %v1536, 0.0
        %vm2038 = vcmp.gt.f32.partialorder %v1538, 0.0
        %vm2039 = vcmp.gt.f32.partialorder %v1541, 0.0
        %vm2040 = vcmp.gt.f32.partialorder %v1543, 0.0
        %vm2041 = vcmp.gt.f32.partialorder %v1546, 0.0
        %vm2042 = vcmp.gt.f32.partialorder %v1548, 0.0
        %vm2043 = vcmp.gt.f32.partialorder %v1551, 0.0
        %vm2044 = vcmp.gt.f32.partialorder %v1553, 0.0
        %vm2045 = vcmp.gt.f32.partialorder %v1556, 0.0
        %vm2046 = vcmp.gt.f32.partialorder %v1558, 0.0
        %vm2047 = vcmp.gt.f32.partialorder %v1561, 0.0
        %vm2048 = vcmp.gt.f32.partialorder %v1563, 0.0
        %vm2049 = vcmp.gt.f32.partialorder %v1566, 0.0
        %vm2050 = vcmp.gt.f32.partialorder %v1568, 0.0
        %vm2051 = vcmp.gt.f32.partialorder %v1571, 0.0
        %vm2052 = vcmp.gt.f32.partialorder %v1573, 0.0
        %vm2053 = vcmp.gt.f32.partialorder %v1576, 0.0
        %vm2054 = vcmp.gt.f32.partialorder %v1578, 0.0
        %vm2055 = vcmp.gt.f32.partialorder %v1581, 0.0
        %vm2056 = vcmp.gt.f32.partialorder %v1583, 0.0
        %vm2057 = vcmp.gt.f32.partialorder %v1586, 0.0
        %vm2058 = vcmp.gt.f32.partialorder %v1588, 0.0
        %vm2059 = vcmp.gt.f32.partialorder %v1591, 0.0
        %vm2060 = vcmp.gt.f32.partialorder %v1593, 0.0
        %vm2061 = vcmp.gt.f32.partialorder %v1596, 0.0
        %vm2062 = vcmp.gt.f32.partialorder %v1598, 0.0
        %vm2063 = vcmp.gt.f32.partialorder %v1601, 0.0
        %vm2064 = vcmp.gt.f32.partialorder %v1603, 0.0
        %vm2065 = vcmp.gt.f32.partialorder %v1606, 0.0
        %vm2066 = vcmp.gt.f32.partialorder %v1608, 0.0
        %vm2067 = vcmp.gt.f32.partialorder %v1611, 0.0
        %vm2068 = vcmp.gt.f32.partialorder %v1613, 0.0
        %vm2069 = vcmp.gt.f32.partialorder %v1616, 0.0
        %vm2070 = vcmp.gt.f32.partialorder %v1618, 0.0
        %vm2071 = vcmp.gt.f32.partialorder %v1621, 0.0
        %vm2072 = vcmp.gt.f32.partialorder %v1623, 0.0
        %v2073 = vsel %vm2009, %v1466, %v1945
        %v2074 = vsel %vm2010, %v1468, %v1946
        %v2075 = vsel %vm2011, %v1471, %v1947
        %v2076 = vsel %vm2012, %v1473, %v1948
        %v2077 = vsel %vm2013, %v1476, %v1949
        %v2078 = vsel %vm2014, %v1478, %v1950
        %v2079 = vsel %vm2015, %v1481, %v1951
        %v2080 = vsel %vm2016, %v1483, %v1952
        %v2081 = vsel %vm2017, %v1486, %v1953
        %v2082 = vsel %vm2018, %v1488, %v1954
        %v2083 = vsel %vm2019, %v1491, %v1955
        %v2084 = vsel %vm2020, %v1493, %v1956
        %v2085 = vsel %vm2021, %v1496, %v1957
        %v2086 = vsel %vm2022, %v1498, %v1958
        %v2087 = vsel %vm2023, %v1501, %v1959
        %v2088 = vsel %vm2024, %v1503, %v1960
        %v2089 = vsel %vm2025, %v1506, %v1961
        %v2090 = vsel %vm2026, %v1508, %v1962
        %v2091 = vsel %vm2027, %v1511, %v1963
        %v2092 = vsel %vm2028, %v1513, %v1964
        %v2093 = vsel %vm2029, %v1516, %v1965
        %v2094 = vsel %vm2030, %v1518, %v1966
        %v2095 = vsel %vm2031, %v1521, %v1967
        %v2096 = vsel %vm2032, %v1523, %v1968
        %v2097 = vsel %vm2033, %v1526, %v1969
        %v2098 = vsel %vm2034, %v1528, %v1970
        %v2099 = vsel %vm2035, %v1531, %v1971
        %v2100 = vsel %vm2036, %v1533, %v1972
        %v2101 = vsel %vm2037, %v1536, %v1973
        %v2102 = vsel %vm2038, %v1538, %v1974
        %v2103 = vsel %vm2039, %v1541, %v1975
        %v2104 = vsel %vm2040, %v1543, %v1976
        %v2105 = vsel %vm2041, %v1546, %v1977
        %v2106 = vsel %vm2042, %v1548, %v1978
        %v2107 = vsel %vm2043, %v1551, %v1979
        %v2108 = vsel %vm2044, %v1553, %v1980
        %v2109 = vsel %vm2045, %v1556, %v1981
        %v2110 = vsel %vm2046, %v1558, %v1982
        %v2111 = vsel %vm2047, %v1561, %v1983
        %v2112 = vsel %vm2048, %v1563, %v1984
        %v2113 = vsel %vm2049, %v1566, %v1985
        %v2114 = vsel %vm2050, %v1568, %v1986
        %v2115 = vsel %vm2051, %v1571, %v1987
        %v2116 = vsel %vm2052, %v1573, %v1988
        %v2117 = vsel %vm2053, %v1576, %v1989
        %v2118 = vsel %vm2054, %v1578, %v1990
        %v2119 = vsel %vm2055, %v1581, %v1991
        %v2120 = vsel %vm2056, %v1583, %v1992
        %v2121 = vsel %vm2057, %v1586, %v1993
        %v2122 = vsel %vm2058, %v1588, %v1994
        %v2123 = vsel %vm2059, %v1591, %v1995
        %v2124 = vsel %vm2060, %v1593, %v1996
        %v2125 = vsel %vm2061, %v1596, %v1997
        %v2126 = vsel %vm2062, %v1598, %v1998
        %v2127 = vsel %vm2063, %v1601, %v1999
        %v2128 = vsel %vm2064, %v1603, %v2000
        %v2129 = vsel %vm2065, %v1606, %v2001
        %v2130 = vsel %vm2066, %v1608, %v2002
        %v2131 = vsel %vm2067, %v1611, %v2003
        %v2132 = vsel %vm2068, %v1613, %v2004
        %v2133 = vsel %vm2069, %v1616, %v2005
        %v2134 = vsel %vm2070, %v1618, %v2006
        %v2135 = vsel %vm2071, %v1621, %v2007
        %v2136 = vsel %vm2072, %v1623, %v2008
        %v2137 = vpack.c.bf16 %v2074, %v2073
        %v2138 = vpack.c.bf16 %v2076, %v2075
        %v2139 = vpack.c.bf16 %v2078, %v2077
        %v2140 = vpack.c.bf16 %v2080, %v2079
        %v2141 = vpack.c.bf16 %v2082, %v2081
        %v2142 = vpack.c.bf16 %v2084, %v2083
        %v2143 = vpack.c.bf16 %v2086, %v2085
        %v2144 = vpack.c.bf16 %v2088, %v2087
        %v2145 = vpack.c.bf16 %v2090, %v2089
        %v2146 = vpack.c.bf16 %v2092, %v2091
        %v2147 = vpack.c.bf16 %v2094, %v2093
        %v2148 = vpack.c.bf16 %v2096, %v2095
        %v2149 = vpack.c.bf16 %v2098, %v2097
        %v2150 = vpack.c.bf16 %v2100, %v2099
        %v2151 = vpack.c.bf16 %v2102, %v2101
        %v2152 = vpack.c.bf16 %v2104, %v2103
        %v2153 = vpack.c.bf16 %v2106, %v2105
        %v2154 = vpack.c.bf16 %v2108, %v2107
        %v2155 = vpack.c.bf16 %v2110, %v2109
        %v2156 = vpack.c.bf16 %v2112, %v2111
        %v2157 = vpack.c.bf16 %v2114, %v2113
        %v2158 = vpack.c.bf16 %v2116, %v2115
        %v2159 = vpack.c.bf16 %v2118, %v2117
        %v2160 = vpack.c.bf16 %v2120, %v2119
        %v2161 = vpack.c.bf16 %v2122, %v2121
        %v2162 = vpack.c.bf16 %v2124, %v2123
        %v2163 = vpack.c.bf16 %v2126, %v2125
        %v2164 = vpack.c.bf16 %v2128, %v2127
        %v2165 = vpack.c.bf16 %v2130, %v2129
        %v2166 = vpack.c.bf16 %v2132, %v2131
        %v2167 = vpack.c.bf16 %v2134, %v2133
        %v2168 = vpack.c.bf16 %v2136, %v2135
        %v2169 = vld [vmem:[#allocation8] sm:$0xf]
        %v2170 = vld [vmem:[#allocation8 + $0x4] sm:$0xf]
        %v2171 = vld [vmem:[#allocation8 + $0x8] sm:$0xf]
        %v2172 = vld [vmem:[#allocation8 + $0xc] sm:$0xf]
        %v2173 = vld [vmem:[#allocation8 + $0x10] sm:$0xf]
        %v2174 = vld [vmem:[#allocation8 + $0x14] sm:$0xf]
        %v2175 = vld [vmem:[#allocation8 + $0x18] sm:$0xf]
        %v2176 = vld [vmem:[#allocation8 + $0x1c] sm:$0xf]
        %v2177 = vld [vmem:[#allocation8 + $0x20] sm:$0xf]
        %v2178 = vld [vmem:[#allocation8 + $0x24] sm:$0xf]
        %v2179 = vld [vmem:[#allocation8 + $0x28] sm:$0xf]
        %v2180 = vld [vmem:[#allocation8 + $0x2c] sm:$0xf]
        %v2181 = vld [vmem:[#allocation8 + $0x30] sm:$0xf]
        %v2182 = vld [vmem:[#allocation8 + $0x34] sm:$0xf]
        %v2183 = vld [vmem:[#allocation8 + $0x38] sm:$0xf]
        %v2184 = vld [vmem:[#allocation8 + $0x3c] sm:$0xf]
        %v2185 = vld [vmem:[%s6] sm:$0x1]
        %v2187 = vperm.slane %v2185, 0
        %v2205 = vunpack.c.l.b16 %v2169
        %v2206 = vunpack.c.l.b16 %v2170
        %v2207 = vunpack.c.l.b16 %v2171
        %v2208 = vunpack.c.l.b16 %v2172
        %v2209 = vunpack.c.l.b16 %v2173
        %v2210 = vunpack.c.l.b16 %v2174
        %v2211 = vunpack.c.l.b16 %v2175
        %v2212 = vunpack.c.l.b16 %v2176
        %v2213 = vunpack.c.l.b16 %v2177
        %v2214 = vunpack.c.l.b16 %v2178
        %v2215 = vunpack.c.l.b16 %v2179
        %v2216 = vunpack.c.l.b16 %v2180
        %v2217 = vunpack.c.l.b16 %v2181
        %v2218 = vunpack.c.l.b16 %v2182
        %v2219 = vunpack.c.l.b16 %v2183
        %v2220 = vunpack.c.l.b16 %v2184
        %v2221 = vpack.c.b16 %v2206, %v2205
        %v2222 = vpack.c.b16 %v2208, %v2207
        %v2223 = vpack.c.b16 %v2210, %v2209
        %v2224 = vpack.c.b16 %v2212, %v2211
        %v2225 = vpack.c.b16 %v2214, %v2213
        %v2226 = vpack.c.b16 %v2216, %v2215
        %v2227 = vpack.c.b16 %v2218, %v2217
        %v2228 = vpack.c.b16 %v2220, %v2219
        %2237 = vmatpush.bf16.msra.mxu0 %v2228
        %2238 = vmatpush.bf16.msra.mxu0 %v2227
        %2239 = vmatpush.bf16.msra.mxu0 %v2226
        %2240 = vmatpush.bf16.msra.mxu0 %v2225
        %2241 = vmatpush.bf16.msra.mxu0 %v2224
        %2242 = vmatpush.bf16.msra.mxu0 %v2223
        %2243 = vmatpush.bf16.msra.mxu0 %v2222
        %2244 = vmatpush.bf16.msra.mxu0 %v2221
        %2245 = vmatmul.bf16.gmra.mxu0 %v2137
        %v2246 = vpop.f32.mrf.mxu0
        %v2247 = vadd.f32 %v2187, %v2246
        %v2248 = vpop.f32.mrf.mxu0
        %v2249 = vadd.f32 %v2187, %v2248
        %2250 = vmatmul.bf16.gmra.mxu0 %v2138
        %v2251 = vpop.f32.mrf.mxu0
        %v2252 = vadd.f32 %v2187, %v2251
        %v2253 = vpop.f32.mrf.mxu0
        %v2254 = vadd.f32 %v2187, %v2253
        %2255 = vmatmul.bf16.gmra.mxu0 %v2139
        %v2256 = vpop.f32.mrf.mxu0
        %v2257 = vadd.f32 %v2187, %v2256
        %v2258 = vpop.f32.mrf.mxu0
        %v2259 = vadd.f32 %v2187, %v2258
        %2260 = vmatmul.bf16.gmra.mxu0 %v2140
        %v2261 = vpop.f32.mrf.mxu0
        %v2262 = vadd.f32 %v2187, %v2261
        %v2263 = vpop.f32.mrf.mxu0
        %v2264 = vadd.f32 %v2187, %v2263
        %2265 = vmatmul.bf16.gmra.mxu0 %v2141
        %v2266 = vpop.f32.mrf.mxu0
        %v2267 = vadd.f32 %v2187, %v2266
        %v2268 = vpop.f32.mrf.mxu0
        %v2269 = vadd.f32 %v2187, %v2268
        %2270 = vmatmul.bf16.gmra.mxu0 %v2142
        %v2271 = vpop.f32.mrf.mxu0
        %v2272 = vadd.f32 %v2187, %v2271
        %v2273 = vpop.f32.mrf.mxu0
        %v2274 = vadd.f32 %v2187, %v2273
        %2275 = vmatmul.bf16.gmra.mxu0 %v2143
        %v2276 = vpop.f32.mrf.mxu0
        %v2277 = vadd.f32 %v2187, %v2276
        %v2278 = vpop.f32.mrf.mxu0
        %v2279 = vadd.f32 %v2187, %v2278
        %2280 = vmatmul.bf16.gmra.mxu0 %v2144
        %v2281 = vpop.f32.mrf.mxu0
        %v2282 = vadd.f32 %v2187, %v2281
        %v2283 = vpop.f32.mrf.mxu0
        %v2284 = vadd.f32 %v2187, %v2283
        %2285 = vmatmul.bf16.gmra.mxu0 %v2145
        %v2286 = vpop.f32.mrf.mxu0
        %v2287 = vadd.f32 %v2187, %v2286
        %v2288 = vpop.f32.mrf.mxu0
        %v2289 = vadd.f32 %v2187, %v2288
        %2290 = vmatmul.bf16.gmra.mxu0 %v2146
        %v2291 = vpop.f32.mrf.mxu0
        %v2292 = vadd.f32 %v2187, %v2291
        %v2293 = vpop.f32.mrf.mxu0
        %v2294 = vadd.f32 %v2187, %v2293
        %2295 = vmatmul.bf16.gmra.mxu0 %v2147
        %v2296 = vpop.f32.mrf.mxu0
        %v2297 = vadd.f32 %v2187, %v2296
        %v2298 = vpop.f32.mrf.mxu0
        %v2299 = vadd.f32 %v2187, %v2298
        %2300 = vmatmul.bf16.gmra.mxu0 %v2148
        %v2301 = vpop.f32.mrf.mxu0
        %v2302 = vadd.f32 %v2187, %v2301
        %v2303 = vpop.f32.mrf.mxu0
        %v2304 = vadd.f32 %v2187, %v2303
        %2305 = vmatmul.bf16.gmra.mxu0 %v2149
        %v2306 = vpop.f32.mrf.mxu0
        %v2307 = vadd.f32 %v2187, %v2306
        %v2308 = vpop.f32.mrf.mxu0
        %v2309 = vadd.f32 %v2187, %v2308
        %2310 = vmatmul.bf16.gmra.mxu0 %v2150
        %v2311 = vpop.f32.mrf.mxu0
        %v2312 = vadd.f32 %v2187, %v2311
        %v2313 = vpop.f32.mrf.mxu0
        %v2314 = vadd.f32 %v2187, %v2313
        %2315 = vmatmul.bf16.gmra.mxu0 %v2151
        %v2316 = vpop.f32.mrf.mxu0
        %v2317 = vadd.f32 %v2187, %v2316
        %v2318 = vpop.f32.mrf.mxu0
        %v2319 = vadd.f32 %v2187, %v2318
        %2320 = vmatmul.bf16.gmra.mxu0 %v2152
        %v2321 = vpop.f32.mrf.mxu0
        %v2322 = vadd.f32 %v2187, %v2321
        %v2323 = vpop.f32.mrf.mxu0
        %v2324 = vadd.f32 %v2187, %v2323
        %2325 = vmatmul.bf16.gmra.mxu0 %v2153
        %v2326 = vpop.f32.mrf.mxu0
        %v2327 = vadd.f32 %v2187, %v2326
        %v2328 = vpop.f32.mrf.mxu0
        %v2329 = vadd.f32 %v2187, %v2328
        %2330 = vmatmul.bf16.gmra.mxu0 %v2154
        %v2331 = vpop.f32.mrf.mxu0
        %v2332 = vadd.f32 %v2187, %v2331
        %v2333 = vpop.f32.mrf.mxu0
        %v2334 = vadd.f32 %v2187, %v2333
        %2335 = vmatmul.bf16.gmra.mxu0 %v2155
        %v2336 = vpop.f32.mrf.mxu0
        %v2337 = vadd.f32 %v2187, %v2336
        %v2338 = vpop.f32.mrf.mxu0
        %v2339 = vadd.f32 %v2187, %v2338
        %2340 = vmatmul.bf16.gmra.mxu0 %v2156
        %v2341 = vpop.f32.mrf.mxu0
        %v2342 = vadd.f32 %v2187, %v2341
        %v2343 = vpop.f32.mrf.mxu0
        %v2344 = vadd.f32 %v2187, %v2343
        %2345 = vmatmul.bf16.gmra.mxu0 %v2157
        %v2346 = vpop.f32.mrf.mxu0
        %v2347 = vadd.f32 %v2187, %v2346
        %v2348 = vpop.f32.mrf.mxu0
        %v2349 = vadd.f32 %v2187, %v2348
        %2350 = vmatmul.bf16.gmra.mxu0 %v2158
        %v2351 = vpop.f32.mrf.mxu0
        %v2352 = vadd.f32 %v2187, %v2351
        %v2353 = vpop.f32.mrf.mxu0
        %v2354 = vadd.f32 %v2187, %v2353
        %2355 = vmatmul.bf16.gmra.mxu0 %v2159
        %v2356 = vpop.f32.mrf.mxu0
        %v2357 = vadd.f32 %v2187, %v2356
        %v2358 = vpop.f32.mrf.mxu0
        %v2359 = vadd.f32 %v2187, %v2358
        %2360 = vmatmul.bf16.gmra.mxu0 %v2160
        %v2361 = vpop.f32.mrf.mxu0
        %v2362 = vadd.f32 %v2187, %v2361
        %v2363 = vpop.f32.mrf.mxu0
        %v2364 = vadd.f32 %v2187, %v2363
        %2365 = vmatmul.bf16.gmra.mxu0 %v2161
        %v2366 = vpop.f32.mrf.mxu0
        %v2367 = vadd.f32 %v2187, %v2366
        %v2368 = vpop.f32.mrf.mxu0
        %v2369 = vadd.f32 %v2187, %v2368
        %2370 = vmatmul.bf16.gmra.mxu0 %v2162
        %v2371 = vpop.f32.mrf.mxu0
        %v2372 = vadd.f32 %v2187, %v2371
        %v2373 = vpop.f32.mrf.mxu0
        %v2374 = vadd.f32 %v2187, %v2373
        %2375 = vmatmul.bf16.gmra.mxu0 %v2163
        %v2376 = vpop.f32.mrf.mxu0
        %v2377 = vadd.f32 %v2187, %v2376
        %v2378 = vpop.f32.mrf.mxu0
        %v2379 = vadd.f32 %v2187, %v2378
        %2380 = vmatmul.bf16.gmra.mxu0 %v2164
        %v2381 = vpop.f32.mrf.mxu0
        %v2382 = vadd.f32 %v2187, %v2381
        %v2383 = vpop.f32.mrf.mxu0
        %v2384 = vadd.f32 %v2187, %v2383
        %2385 = vmatmul.bf16.gmra.mxu0 %v2165
        %v2386 = vpop.f32.mrf.mxu0
        %v2387 = vadd.f32 %v2187, %v2386
        %v2388 = vpop.f32.mrf.mxu0
        %v2389 = vadd.f32 %v2187, %v2388
        %2390 = vmatmul.bf16.gmra.mxu0 %v2166
        %v2391 = vpop.f32.mrf.mxu0
        %v2392 = vadd.f32 %v2187, %v2391
        %v2393 = vpop.f32.mrf.mxu0
        %v2394 = vadd.f32 %v2187, %v2393
        %2395 = vmatmul.bf16.gmra.mxu0 %v2167
        %v2396 = vpop.f32.mrf.mxu0
        %v2397 = vadd.f32 %v2187, %v2396
        %v2398 = vpop.f32.mrf.mxu0
        %v2399 = vadd.f32 %v2187, %v2398
        %2400 = vmatmul.bf16.gmra.mxu0 %v2168
        %v2401 = vpop.f32.mrf.mxu0
        %v2402 = vadd.f32 %v2187, %v2401
        %v2403 = vpop.f32.mrf.mxu0
        %v2404 = vadd.f32 %v2187, %v2403
        %2405 = vdwg.mxu0
        %2406 = vst [vmem:[%s348] sm:$0xff] %v2247
        %2407 = vst [vmem:[%s348 + $0x8] sm:$0xff] %v2249
        %2408 = vst [vmem:[%s348 + $0x10] sm:$0xff] %v2252
        %2409 = vst [vmem:[%s348 + $0x18] sm:$0xff] %v2254
        %2410 = vst [vmem:[%s348 + $0x20] sm:$0xff] %v2257
        %2411 = vst [vmem:[%s348 + $0x28] sm:$0xff] %v2259
        %2412 = vst [vmem:[%s348 + $0x30] sm:$0xff] %v2262
        %2413 = vst [vmem:[%s348 + $0x38] sm:$0xff] %v2264
        %2414 = vst [vmem:[%s348 + $0x40] sm:$0xff] %v2267
        %2415 = vst [vmem:[%s348 + $0x48] sm:$0xff] %v2269
        %2416 = vst [vmem:[%s348 + $0x50] sm:$0xff] %v2272
        %2417 = vst [vmem:[%s348 + $0x58] sm:$0xff] %v2274
        %2418 = vst [vmem:[%s348 + $0x60] sm:$0xff] %v2277
        %2419 = vst [vmem:[%s348 + $0x68] sm:$0xff] %v2279
        %2420 = vst [vmem:[%s348 + $0x70] sm:$0xff] %v2282
        %2421 = vst [vmem:[%s348 + $0x78] sm:$0xff] %v2284
        %2422 = vst [vmem:[%s348 + $0x80] sm:$0xff] %v2287
        %2423 = vst [vmem:[%s348 + $0x88] sm:$0xff] %v2289
        %2424 = vst [vmem:[%s348 + $0x90] sm:$0xff] %v2292
        %2425 = vst [vmem:[%s348 + $0x98] sm:$0xff] %v2294
        %2426 = vst [vmem:[%s348 + $0xa0] sm:$0xff] %v2297
        %2427 = vst [vmem:[%s348 + $0xa8] sm:$0xff] %v2299
        %2428 = vst [vmem:[%s348 + $0xb0] sm:$0xff] %v2302
        %2429 = vst [vmem:[%s348 + $0xb8] sm:$0xff] %v2304
        %2430 = vst [vmem:[%s348 + $0xc0] sm:$0xff] %v2307
        %2431 = vst [vmem:[%s348 + $0xc8] sm:$0xff] %v2309
        %2432 = vst [vmem:[%s348 + $0xd0] sm:$0xff] %v2312
        %2433 = vst [vmem:[%s348 + $0xd8] sm:$0xff] %v2314
        %2434 = vst [vmem:[%s348 + $0xe0] sm:$0xff] %v2317
        %2435 = vst [vmem:[%s348 + $0xe8] sm:$0xff] %v2319
        %2436 = vst [vmem:[%s348 + $0xf0] sm:$0xff] %v2322
        %2437 = vst [vmem:[%s348 + $0xf8] sm:$0xff] %v2324
        %2438 = vst [vmem:[%s348 + $0x100] sm:$0xff] %v2327
        %2439 = vst [vmem:[%s348 + $0x108] sm:$0xff] %v2329
        %2440 = vst [vmem:[%s348 + $0x110] sm:$0xff] %v2332
        %2441 = vst [vmem:[%s348 + $0x118] sm:$0xff] %v2334
        %2442 = vst [vmem:[%s348 + $0x120] sm:$0xff] %v2337
        %2443 = vst [vmem:[%s348 + $0x128] sm:$0xff] %v2339
        %2444 = vst [vmem:[%s348 + $0x130] sm:$0xff] %v2342
        %2445 = vst [vmem:[%s348 + $0x138] sm:$0xff] %v2344
        %2446 = vst [vmem:[%s348 + $0x140] sm:$0xff] %v2347
        %2447 = vst [vmem:[%s348 + $0x148] sm:$0xff] %v2349
        %2448 = vst [vmem:[%s348 + $0x150] sm:$0xff] %v2352
        %2449 = vst [vmem:[%s348 + $0x158] sm:$0xff] %v2354
        %2450 = vst [vmem:[%s348 + $0x160] sm:$0xff] %v2357
        %2451 = vst [vmem:[%s348 + $0x168] sm:$0xff] %v2359
        %2452 = vst [vmem:[%s348 + $0x170] sm:$0xff] %v2362
        %2453 = vst [vmem:[%s348 + $0x178] sm:$0xff] %v2364
        %2454 = vst [vmem:[%s348 + $0x180] sm:$0xff] %v2367
        %2455 = vst [vmem:[%s348 + $0x188] sm:$0xff] %v2369
        %2456 = vst [vmem:[%s348 + $0x190] sm:$0xff] %v2372
        %2457 = vst [vmem:[%s348 + $0x198] sm:$0xff] %v2374
        %2458 = vst [vmem:[%s348 + $0x1a0] sm:$0xff] %v2377
        %2459 = vst [vmem:[%s348 + $0x1a8] sm:$0xff] %v2379
        %2460 = vst [vmem:[%s348 + $0x1b0] sm:$0xff] %v2382
        %2461 = vst [vmem:[%s348 + $0x1b8] sm:$0xff] %v2384
        %2462 = vst [vmem:[%s348 + $0x1c0] sm:$0xff] %v2387
        %2463 = vst [vmem:[%s348 + $0x1c8] sm:$0xff] %v2389
        %2464 = vst [vmem:[%s348 + $0x1d0] sm:$0xff] %v2392
        %2465 = vst [vmem:[%s348 + $0x1d8] sm:$0xff] %v2394
        %2466 = vst [vmem:[%s348 + $0x1e0] sm:$0xff] %v2397
        %2467 = vst [vmem:[%s348 + $0x1e8] sm:$0xff] %v2399
        %2468 = vst [vmem:[%s348 + $0x1f0] sm:$0xff] %v2402
        %2469 = vst [vmem:[%s348 + $0x1f8] sm:$0xff] %v2404
        %s2470 = sand.u32 %s186, 1
        %s2471 = scalar_lea.sflag [#allocation4], %s2470
        %s2472 = sand.u32 %s186, 1
        %s2473 = smul.addr %s2472, 512
        %s2474 = scalar_lea.vmem [#allocation10], %s2473
        // Predicated region
        $region65: #{tpu_custom_call.1} parent=47 // pred_check
          %p2475 = pneg %p196
        $region66: #{tpu_custom_call.1} parent=47 // pred_check_branch
          %2477 = sbr.rel (%p2475) target = $region68
        $region67: #{tpu_custom_call.1} parent=47 // pred_region
          %s2478 = smul.u32 64, %s26
          %2480 = vsyncadd %s2471, 0
          %s2481 = smul.addr %s2478, 8
          %s2482 = scalar_lea.hbm %s7, %s2481
          %s2483 = sshll.u32 %s2474, 4
          %s2484 = int_to_ptr.vmem [resolvable:$true] %s2483
          %s2485 = sshll.u32 %s2482, 4
          %s2486 = int_to_ptr.hbm [resolvable:$true] %s2485
          %2491 = dma.vmem_to_hbm [thread:$0]  %s2484, 8192, %s2486, %s2471, 128, 128, 8
        $region68: #{tpu_custom_call.1} parent=47 // pred_fallthru
          _
      $region48: #{tpu_custom_call.1} parent=5 // pred_fallthru
        _
      %p2492 = scmp.le.s32.totalorder 2, %s21
      // Predicated region
      $region69: #{tpu_custom_call.1} parent=5 // pred_check
        %p2493 = pneg %p2492
      $region70: #{tpu_custom_call.1} parent=5 // pred_check_branch
        %2495 = sbr.rel (%p2493) target = $region72
      $region71: #{tpu_custom_call.1} parent=5 // pred_region
        %s2496 = ssub.s32 %s21, 2
        // Predicated region
        $region73: #{tpu_custom_call.1} parent=71 // pred_check
          %p2497 = pneg %p202
        $region74: #{tpu_custom_call.1} parent=71 // pred_check_branch
          %2499 = sbr.rel (%p2497) target = $region76
        $region75: #{tpu_custom_call.1} parent=71 // pred_region
          %s2500 = sand.u32 %s187, 1
          %s2501 = scalar_lea.sflag [#allocation4], %s2500
          %s2502 = sand.u32 %s187, 1
          %s2503 = smul.addr %s2502, 512
          %s2504 = scalar_lea.vmem [#allocation10], %s2503
          %2506 = dma.done %s2501, 8192
        $region76: #{tpu_custom_call.1} parent=71 // pred_fallthru
          _
      $region72: #{tpu_custom_call.1} parent=5 // pred_fallthru
        _
    $region6: #{tpu_custom_call.1} parent=1 // loop_footer
      %s25 = sadd.s32 1, %s21
    $region7: #{tpu_custom_call.1} parent=1 // loop_footer_branch
      %20 = sbr.rel target = $region3
    $region8: #{tpu_custom_call.1} parent=1 // loop_exit
      _
    %2507 = vsyncpa [#allocation3], 1
    %s2508 = scalar_lea.sflag [#allocation3], 1
    %2509 = vsyncpa %s2508, 1
    %2510 = vsyncpa [#allocation6], 1
    %2511 = vsyncpa [#allocation9], 1
    %2512 = vsyncpa [#allocation4], 1
    %s2513 = scalar_lea.sflag [#allocation4], 1
    %2514 = vsyncpa %s2513, 1

</llo_original>
